<compile_context>
chip_gen: v5e
topology: v5e:2x2
jax: 0.10.0
libtpu: 0.0.40
codegen_flags: <defaults>
</compile_context>

<pallas_src>
import jax
import jax.numpy as jnp
from jax.experimental import pallas as pl
from jax.experimental.pallas import tpu as pltpu

EPS = 1e-5  # nn.BatchNorm2d default


def _conv3x3_rows(mid, top, bot, w_ref, out_ref, stats_ref, pad_s):
    """3x3 'same' conv of one (nb, TH, W, C) row tile.

    mid : (nb, TH, W, C) f32  -- tile rows (any pre-activation already applied)
    top : (nb, 1,  W, C) f32  -- row above the tile (ignored at the image top)
    bot : (nb, 1,  W, C) f32  -- row below the tile (ignored at the image bottom)

    Writes the pre-BN conv output to out_ref and this tile's per-channel BN
    partials [sum, centered-sum-of-squares] to stats_ref.
    """
    nb, TH, W, C = mid.shape
    Cout = out_ref.shape[-1]
    cdtype = pad_s.dtype                       # MXU operand dtype (bf16 or f32)
    r = pl.program_id(1)
    last = pl.num_programs(1) - 1

    # ---- padded tile: conv zero padding on the image border, real neighbour
    # rows elsewhere.  Every element of pad_s is rewritten each grid step, so
    # the persistent scratch is safe under megacore grid partitioning.
    zcol = jnp.zeros((nb, TH + 2, 1, C), cdtype)
    zrow = jnp.zeros((nb, 1, W, C), cdtype)
    pad_s[:, :, 0:1, :] = zcol
    pad_s[:, :, W + 1:W + 2, :] = zcol
    pad_s[:, 1:TH + 1, 1:W + 1, :] = mid.astype(cdtype)
    pad_s[:, 0:1, 1:W + 1, :] = jnp.where(r == 0, zrow, top.astype(cdtype))
    pad_s[:, TH + 1:TH + 2, 1:W + 1, :] = jnp.where(r == last, zrow,
                                                    bot.astype(cdtype))

    # ---- 9 accumulating MXU dots straight out of the padded tile
    # (no im2col slab: no 9x-input VMEM scratch, no extra full-tile vst/vld).
    M = nb * TH * W
    acc = jnp.zeros((M, Cout), jnp.float32)
    for kh in range(3):
        for kw in range(3):
            t = kh * 3 + kw
            win = pad_s[:, kh:kh + TH, kw:kw + W, :].reshape(M, C)
            acc = acc + jnp.dot(win, w_ref[t * C:(t + 1) * C, :],
                                preferred_element_type=jnp.float32)

    # ---- per-tile BN partials in shifted (tile-mean-centred) form so the
    # wrapper can do a numerically stable Chan/Welford combine.
    s = jnp.sum(acc, axis=0)                                   # (Cout,)
    mu = s * (1.0 / M)
    d = acc - mu[None, :]
    css = jnp.sum(d * d, axis=0)                               # (Cout,)
    stats_ref[:, :, 0:1, :] = s.reshape(1, 1, 1, Cout)
    stats_ref[:, :, 1:2, :] = css.reshape(1, 1, 1, Cout)

    out_ref[...] = acc.reshape(out_ref.shape).astype(out_ref.dtype)


def conv1_kernel(xm_ref, xt_ref, xb_ref, w_ref, y_ref, st_ref, pad_s):
    _conv3x3_rows(xm_ref[...], xt_ref[...], xb_ref[...],
                  w_ref, y_ref, st_ref, pad_s)


def bn_relu_conv2_kernel(ym_ref, yt_ref, yb_ref, sc_ref, sh_ref, w_ref,
                         y_ref, st_ref, pad_s):
    # bn1 (global batch stats folded into scale/shift by the wrapper) + ReLU,
    # applied to the tile rows and both halo rows, then the second conv.
    C = sc_ref.shape[-1]
    sc = sc_ref[...].reshape(1, 1, 1, C)
    sh = sh_ref[...].reshape(1, 1, 1, C)
    act = lambda v: jnp.maximum(v.astype(jnp.float32) * sc + sh, 0.0)
    _conv3x3_rows(act(ym_ref[...]), act(yt_ref[...]), act(yb_ref[...]),
                  w_ref, y_ref, st_ref, pad_s)


def bn2_residual_relu_kernel(y2_ref, x_ref, sc_ref, sh_ref, out_ref):
    # bn2 affine + residual add + final ReLU, all on lane-dense (.., W*C) tiles.
    out_ref[...] = jnp.maximum(
        y2_ref[...].astype(jnp.float32) * sc_ref[...] + sh_ref[...] + x_ref[...],
        0.0)


def _pick_row_tile(h):
    """Largest divisor of h <= max(8, h // 8): enough row tiles for pipelining
    on small images, small 1-row-halo re-read overhead on large ones."""
    target = max(8, h // 8)
    th = 1
    for cand in range(1, min(h, target) + 1):
        if h % cand == 0:
            th = cand
    return th


def _vmem_limit(need_bytes):
    # Explicit scoped-VMEM budget (a tile tuned on v5e/v6e's 128 MiB can blow
    # v7x's 64 MiB).  Clamp to [32 MiB, 48 MiB] to leave headroom everywhere.
    return int(min(max(2 * need_bytes + (4 << 20), 32 << 20), 48 << 20))


def _bn_scale_shift(stats, gamma, beta, m_tile, m_total):
    """Fold per-tile [sum, centered-sum-of-squares] partials into the BN
    affine (training-mode batch stats, biased variance, eps=1e-5) using a
    numerically stable Chan combine."""
    s_t = stats[..., 0, :]                       # (nt, nrt, C) per-tile sums
    css_t = stats[..., 1, :]                     # per-tile centred sq-sums
    c = s_t.shape[-1]
    mean = jnp.sum(s_t, axis=(0, 1)) / m_total
    mu_t = s_t / m_tile
    css = (jnp.sum(css_t, axis=(0, 1))
           + m_tile * jnp.sum((mu_t - mean) ** 2, axis=(0, 1)))
    var = css / m_total
    inv = jax.lax.rsqrt(var + EPS)
    scale = (gamma * inv).reshape(1, c).astype(jnp.float32)
    shift = (beta - gamma * mean * inv).reshape(1, c).astype(jnp.float32)
    return scale, shift


def basic_block_forward_nhwc(x_nhwc, params, *, mxu_dtype=jnp.bfloat16,
                             act_dtype=jnp.bfloat16, batch_tile=1,
                             row_tile=None):
    """Pallas BasicBlock forward, NHWC entry point (no layout transposes).

    mxu_dtype: matmul operand dtype (bf16 recommended; f32 for tight parity).
    act_dtype: HBM dtype of the inter-pass activations y1/y2 (bf16 halves the
               HBM traffic of the two intermediate tensors).
    """
    x = x_nhwc.astype(jnp.float32)
    N, H, W, Cin = x.shape
    Cout = params["w1"].shape[0]            # torch conv weight: (Cout, Cin, 3, 3)
    assert Cin == Cout, "downsample=None requires inplanes == planes"

    nb = batch_tile
    assert N % nb == 0
    TH = row_tile if row_tile is not None else _pick_row_tile(H)
    assert H % TH == 0
    nt, nrt = N // nb, H // TH
    m_tile = nb * TH * W
    m_total = N * H * W
    msize = jnp.dtype(mxu_dtype).itemsize
    asize = jnp.dtype(act_dtype).itemsize

    # torch (Cout, Cin, kh, kw) -> (kh, kw, Cin, Cout) -> (9*Cin, Cout).
    w1 = jnp.transpose(params["w1"], (2, 3, 1, 0)).reshape(9 * Cin, Cout).astype(mxu_dtype)
    w2 = jnp.transpose(params["w2"], (2, 3, 1, 0)).reshape(9 * Cout, Cout).astype(mxu_dtype)
    # Conv biases b1/b2 are intentionally NOT used: a per-channel bias cancels
    # exactly against the training-mode BN mean subtraction that follows.

    # --- BlockSpecs: grid (batch tiles, row tiles).  The two 1-row specs
    # fetch the halo rows above/below the tile; their index is clamped at the
    # image border, where the kernel substitutes the conv zero padding.
    mid_spec = lambda c: pl.BlockSpec((nb, TH, W, c),
                                      lambda i, r: (i, r, 0, 0))
    top_spec = lambda c: pl.BlockSpec(
        (nb, 1, W, c), lambda i, r: (i, jnp.maximum(r * TH - 1, 0), 0, 0))
    bot_spec = lambda c: pl.BlockSpec(
        (nb, 1, W, c), lambda i, r: (i, jnp.minimum(r * TH + TH, H - 1), 0, 0))
    whole = lambda shape: pl.BlockSpec(shape, lambda i, r: (0,) * len(shape))
    out_spec = pl.BlockSpec((nb, TH, W, Cout), lambda i, r: (i, r, 0, 0))
    stats_spec = pl.BlockSpec((1, 1, 2, Cout), lambda i, r: (i, r, 0, 0))

    def conv_pass(kernel, inputs, extra_specs, cin, in_itemsize):
        # per-step VMEM demand (double-buffered blocks + weights + scratch).
        need = (2 * (nb * (TH + 2) * W * cin * in_itemsize       # mid + halos
                     + nb * TH * W * Cout * asize                # conv output
                     + 9 * cin * Cout * msize)                   # weights
                + nb * (TH + 2) * (W + 2) * cin * msize)         # pad scratch
        cost = pl.CostEstimate(
            flops=2 * m_total * 9 * cin * Cout,
            transcendentals=0,
            bytes_accessed=m_total * (cin * in_itemsize + Cout * asize)
            + 9 * cin * Cout * msize)
        return pl.pallas_call(
            kernel,
            out_shape=(jax.ShapeDtypeStruct((N, H, W, Cout), act_dtype),
                       jax.ShapeDtypeStruct((nt, nrt, 2, Cout), jnp.float32)),
            grid=(nt, nrt),
            in_specs=[mid_spec(cin), top_spec(cin), bot_spec(cin)]
            + extra_specs + [whole((9 * cin, Cout))],
            out_specs=(out_spec, stats_spec),
            scratch_shapes=[pltpu.VMEM((nb, TH + 2, W + 2, cin), mxu_dtype)],
            compiler_params=pltpu.CompilerParams(
                dimension_semantics=("parallel", "parallel"),
                vmem_limit_bytes=_vmem_limit(need)),
            cost_estimate=cost,
        )(*inputs)

    # ---- pass 1: conv1 (pre-BN) + bn1 partial stats --------------------------
    y1, st1 = conv_pass(conv1_kernel, (x, x, x, w1), [], Cin, 4)
    scale1, shift1 = _bn_scale_shift(st1, params["g1"], params["be1"],
                                     m_tile, m_total)

    # ---- pass 2: bn1 affine + ReLU + conv2 (pre-BN) + bn2 partial stats ------
    y2, st2 = conv_pass(bn_relu_conv2_kernel, (y1, y1, y1, scale1, shift1, w2),
                        [whole((1, Cout)), whole((1, Cout))], Cout, asize)
    scale2, shift2 = _bn_scale_shift(st2, params["g2"], params["be2"],
                                     m_tile, m_total)

    # ---- pass 3: bn2 affine + residual + final ReLU (lane-dense) -------------
    # (N,H,W,C) -> (N,H,W*C) is a free row-major reshape; it makes every load
    # and store of this purely elementwise pass full-lane even for small C.
    xf = x.reshape(N, H, W * Cin)
    y2f = y2.reshape(N, H, W * Cout)
    scale2f = jnp.tile(scale2, (1, W))
    shift2f = jnp.tile(shift2, (1, W))
    flat_spec = pl.BlockSpec((nb, TH, W * Cout), lambda i, r: (i, r, 0))
    need3 = 2 * nb * TH * W * Cout * (asize + 4 + 4)
    out_f = pl.pallas_call(
        bn2_residual_relu_kernel,
        out_shape=jax.ShapeDtypeStruct((N, H, W * Cout), jnp.float32),
        grid=(nt, nrt),
        in_specs=[flat_spec, flat_spec,
                  whole((1, W * Cout)), whole((1, W * Cout))],
        out_specs=flat_spec,
        compiler_params=pltpu.CompilerParams(
            dimension_semantics=("parallel", "parallel"),
            vmem_limit_bytes=_vmem_limit(need3)),
        cost_estimate=pl.CostEstimate(
            flops=3 * m_total * Cout, transcendentals=0,
            bytes_accessed=m_total * Cout * (asize + 4 + 4)),
    )(y2f, xf, scale2f, shift2f)

    return out_f.reshape(N, H, W, Cout)


def basic_block_forward(x_nchw, params, **kw):
    """PyTorch-layout (NCHW) convenience wrapper.  Prefer the NHWC entry point
    above: it avoids two full-tensor HBM transpose passes at the boundary."""
    x = jnp.transpose(x_nchw, (0, 2, 3, 1))
    out = basic_block_forward_nhwc(x, params, **kw)
    return jnp.transpose(out, (0, 3, 1, 2))


def basic_block_reference_nhwc(x, params):
    """Pure-JAX NHWC reference (same math as the PyTorch module, f32 convs)."""
    def conv(a, w, b):
        y = jax.lax.conv_general_dilated(
            a, jnp.transpose(w, (2, 3, 1, 0)), window_strides=(1, 1),
            padding=((1, 1), (1, 1)),
            dimension_numbers=("NHWC", "HWIO", "NHWC"))
        return y + b[None, None, None, :]

    def bn(a, g, be):
        mean = jnp.mean(a, axis=(0, 1, 2), keepdims=True)
        var = jnp.mean((a - mean) ** 2, axis=(0, 1, 2), keepdims=True)
        return g * (a - mean) * jax.lax.rsqrt(var + EPS) + be

    out = jnp.maximum(bn(conv(x, params["w1"], params["b1"]),
                         params["g1"], params["be1"]), 0.0)
    out = bn(conv(out, params["w2"], params["b2"]), params["g2"], params["be2"])
    return jnp.maximum(out + x, 0.0)


if __name__ == "__main__":
    N, C, H, W = 2, 4, 16, 16          # inplanes = planes = 4, stride = 1
    key = jax.random.PRNGKey(0)
    keys = jax.random.split(key, 8)

    x_nchw = jax.random.normal(keys[0], (N, C, H, W), jnp.float32)
    params = {
        "w1": 0.1 * jax.random.normal(keys[1], (C, C, 3, 3), jnp.float32),
        "b1": 0.1 * jax.random.normal(keys[2], (C,), jnp.float32),
        "w2": 0.1 * jax.random.normal(keys[3], (C, C, 3, 3), jnp.float32),
        "b2": 0.1 * jax.random.normal(keys[4], (C,), jnp.float32),
        "g1": 1.0 + 0.1 * jax.random.normal(keys[5], (C,), jnp.float32),
        "be1": 0.1 * jax.random.normal(keys[6], (C,), jnp.float32),
        "g2": 1.0 + 0.1 * jax.random.normal(keys[7], (C,), jnp.float32),
        "be2": jnp.zeros((C,), jnp.float32),
    }

    x_nhwc = jnp.transpose(x_nchw, (0, 2, 3, 1))
    ref = jax.block_until_ready(basic_block_reference_nhwc(x_nhwc, params))

    # Exact-semantics check: f32 MXU operands + f32 intermediates.
    out_f32 = jax.block_until_ready(
        basic_block_forward_nhwc(x_nhwc, params,
                                 mxu_dtype=jnp.float32, act_dtype=jnp.float32))
    assert out_f32.shape == (N, H, W, C)
    err32 = float(jnp.max(jnp.abs(out_f32 - ref)))
    assert jnp.allclose(out_f32, ref, atol=1e-3, rtol=1e-3), (
        f"f32 max abs err = {err32}")

    # Performance-default path: bf16 MXU operands + bf16 inter-pass
    # activations, f32 accumulation / BN / elementwise math.
    out_bf = jax.block_until_ready(basic_block_forward_nhwc(x_nhwc, params))
    assert out_bf.shape == (N, H, W, C)
    errbf = float(jnp.max(jnp.abs(out_bf - ref)))
    assert jnp.allclose(out_bf, ref, atol=1.5e-1, rtol=1.5e-1), (
        f"bf16 max abs err = {errbf}")

    print("KERNEL_OK")
</pallas_src>

<mosaic_0001>
module attributes {stable_mosaic.version = 11 : i64} {
  func.func @conv1_kernel(%arg0: i32, %arg1: i32, %arg2: memref<1x8x16x4xf32, #tpu.memory_space<vmem>>, %arg3: memref<1x1x16x4xf32, #tpu.memory_space<vmem>>, %arg4: memref<1x1x16x4xf32, #tpu.memory_space<vmem>>, %arg5: memref<36x4xf32, #tpu.memory_space<vmem>>, %arg6: memref<1x8x16x4xf32, #tpu.memory_space<vmem>>, %arg7: memref<1x1x2x4xf32, #tpu.memory_space<vmem>>, %arg8: memref<1x10x18x4xf32, #tpu.memory_space<vmem>>) attributes {dimension_semantics = [#tpu.dimension_semantics<parallel>, #tpu.dimension_semantics<parallel>], iteration_bounds = array<i64: 2, 2>, scalar_prefetch = 0 : i64, scratch_operands = 1 : i64, tpu.core_type = #tpu.core_type<tc>, window_params = [{transform_indices = @transform_0, window_bounds = array<i64: 1, 8, 16, 4>}, {transform_indices = @transform_1, window_bounds = array<i64: 1, 1, 16, 4>}, {transform_indices = @transform_2, window_bounds = array<i64: 1, 1, 16, 4>}, {pipeline_mode = #tpu.pipeline_mode<synchronous>, transform_indices = @transform_3, window_bounds = array<i64: 36, 4>}, {transform_indices = @transform_4, window_bounds = array<i64: 1, 8, 16, 4>}, {transform_indices = @transform_5, window_bounds = array<i64: 1, 1, 2, 4>}]} {
    %c0 = arith.constant 0 : index
    %c0_0 = arith.constant 0 : index
    %c0_1 = arith.constant 0 : index
    %c0_2 = arith.constant 0 : index
    %0 = vector.load %arg2[%c0, %c0_0, %c0_1, %c0_2] : memref<1x8x16x4xf32, #tpu.memory_space<vmem>>, vector<1x8x16x4xf32>
    %c0_3 = arith.constant 0 : index
    %c0_4 = arith.constant 0 : index
    %c0_5 = arith.constant 0 : index
    %c0_6 = arith.constant 0 : index
    %1 = vector.load %arg3[%c0_3, %c0_4, %c0_5, %c0_6] : memref<1x1x16x4xf32, #tpu.memory_space<vmem>>, vector<1x1x16x4xf32>
    %c0_7 = arith.constant 0 : index
    %c0_8 = arith.constant 0 : index
    %c0_9 = arith.constant 0 : index
    %c0_10 = arith.constant 0 : index
    %2 = vector.load %arg4[%c0_7, %c0_8, %c0_9, %c0_10] : memref<1x1x16x4xf32, #tpu.memory_space<vmem>>, vector<1x1x16x4xf32>
    %cst = arith.constant 0.000000e+00 : f32
    %3 = vector.broadcast %cst : f32 to vector<1x10x1x4xf32>
    %cst_11 = arith.constant 0.000000e+00 : f32
    %4 = vector.broadcast %cst_11 : f32 to vector<1x1x16x4xf32>
    %c0_12 = arith.constant 0 : index
    %c0_13 = arith.constant 0 : index
    %c0_14 = arith.constant 0 : index
    %c0_15 = arith.constant 0 : index
    %5 = vector.load %arg8[%c0_12, %c0_13, %c0_14, %c0_15] : memref<1x10x18x4xf32, #tpu.memory_space<vmem>>, vector<1x10x1x4xf32>
    tpu.vector_store %arg8[%c0_12, %c0_13, %c0_14, %c0_15], %3 {strides = array<i32>} : memref<1x10x18x4xf32, #tpu.memory_space<vmem>>, vector<1x10x1x4xf32>,
    %c0_16 = arith.constant 0 : index
    %c0_17 = arith.constant 0 : index
    %c17 = arith.constant 17 : index
    %c0_18 = arith.constant 0 : index
    %6 = vector.load %arg8[%c0_16, %c0_17, %c17, %c0_18] : memref<1x10x18x4xf32, #tpu.memory_space<vmem>>, vector<1x10x1x4xf32>
    tpu.vector_store %arg8[%c0_16, %c0_17, %c17, %c0_18], %3 {strides = array<i32>} : memref<1x10x18x4xf32, #tpu.memory_space<vmem>>, vector<1x10x1x4xf32>,
    %c0_19 = arith.constant 0 : index
    %c1 = arith.constant 1 : index
    %c1_20 = arith.constant 1 : index
    %c0_21 = arith.constant 0 : index
    %7 = vector.load %arg8[%c0_19, %c1, %c1_20, %c0_21] : memref<1x10x18x4xf32, #tpu.memory_space<vmem>>, vector<1x8x16x4xf32>
    tpu.vector_store %arg8[%c0_19, %c1, %c1_20, %c0_21], %0 {strides = array<i32>} : memref<1x10x18x4xf32, #tpu.memory_space<vmem>>, vector<1x8x16x4xf32>,
    %c0_i32 = arith.constant 0 : i32
    %8 = arith.cmpi eq, %arg1, %c0_i32 : i32
    %9 = arith.select %8, %4, %1 : vector<1x1x16x4xf32>
    %c0_22 = arith.constant 0 : index
    %c0_23 = arith.constant 0 : index
    %c1_24 = arith.constant 1 : index
    %c0_25 = arith.constant 0 : index
    %10 = vector.load %arg8[%c0_22, %c0_23, %c1_24, %c0_25] : memref<1x10x18x4xf32, #tpu.memory_space<vmem>>, vector<1x1x16x4xf32>
    tpu.vector_store %arg8[%c0_22, %c0_23, %c1_24, %c0_25], %9 {strides = array<i32>} : memref<1x10x18x4xf32, #tpu.memory_space<vmem>>, vector<1x1x16x4xf32>,
    %c1_i32 = arith.constant 1 : i32
    %11 = arith.cmpi eq, %arg1, %c1_i32 : i32
    %12 = arith.select %11, %4, %2 : vector<1x1x16x4xf32>
    %c0_26 = arith.constant 0 : index
    %c9 = arith.constant 9 : index
    %c1_27 = arith.constant 1 : index
    %c0_28 = arith.constant 0 : index
    %13 = vector.load %arg8[%c0_26, %c9, %c1_27, %c0_28] : memref<1x10x18x4xf32, #tpu.memory_space<vmem>>, vector<1x1x16x4xf32>
    tpu.vector_store %arg8[%c0_26, %c9, %c1_27, %c0_28], %12 {strides = array<i32>} : memref<1x10x18x4xf32, #tpu.memory_space<vmem>>, vector<1x1x16x4xf32>,
    %cst_29 = arith.constant 0.000000e+00 : f32
    %14 = vector.broadcast %cst_29 : f32 to vector<128x4xf32>
    %c0_30 = arith.constant 0 : index
    %c0_31 = arith.constant 0 : index
    %c0_32 = arith.constant 0 : index
    %c0_33 = arith.constant 0 : index
    %15 = vector.load %arg8[%c0_30, %c0_31, %c0_32, %c0_33] : memref<1x10x18x4xf32, #tpu.memory_space<vmem>>, vector<1x8x16x4xf32>
    %16 = vector.shape_cast %15 : vector<1x8x16x4xf32> to vector<128x4xf32>
    %c0_34 = arith.constant 0 : index
    %c0_35 = arith.constant 0 : index
    %17 = vector.load %arg5[%c0_34, %c0_35] : memref<36x4xf32, #tpu.memory_space<vmem>>, vector<4x4xf32>
    %cst_36 = arith.constant dense<0.000000e+00> : vector<128x4xf32>
    %18 = tpu.matmul %16, %17, %cst_36 {dimension_numbers = #tpu.dot_dimension_numbers<[1], [0], [0], [1], [0, 0, 1, 1], [], []>} : vector<128x4xf32>, vector<4x4xf32>, vector<128x4xf32> -> vector<128x4xf32>
    %19 = arith.addf %14, %18 : vector<128x4xf32>
    %c0_37 = arith.constant 0 : index
    %c0_38 = arith.constant 0 : index
    %c1_39 = arith.constant 1 : index
    %c0_40 = arith.constant 0 : index
    %20 = vector.load %arg8[%c0_37, %c0_38, %c1_39, %c0_40] : memref<1x10x18x4xf32, #tpu.memory_space<vmem>>, vector<1x8x16x4xf32>
    %21 = vector.shape_cast %20 : vector<1x8x16x4xf32> to vector<128x4xf32>
    %c4 = arith.constant 4 : index
    %c0_41 = arith.constant 0 : index
    %22 = vector.load %arg5[%c4, %c0_41] : memref<36x4xf32, #tpu.memory_space<vmem>>, vector<4x4xf32>
    %cst_42 = arith.constant dense<0.000000e+00> : vector<128x4xf32>
    %23 = tpu.matmul %21, %22, %cst_42 {dimension_numbers = #tpu.dot_dimension_numbers<[1], [0], [0], [1], [0, 0, 1, 1], [], []>} : vector<128x4xf32>, vector<4x4xf32>, vector<128x4xf32> -> vector<128x4xf32>
    %24 = arith.addf %19, %23 : vector<128x4xf32>
    %c0_43 = arith.constant 0 : index
    %c0_44 = arith.constant 0 : index
    %c2 = arith.constant 2 : index
    %c0_45 = arith.constant 0 : index
    %25 = vector.load %arg8[%c0_43, %c0_44, %c2, %c0_45] : memref<1x10x18x4xf32, #tpu.memory_space<vmem>>, vector<1x8x16x4xf32>
    %26 = vector.shape_cast %25 : vector<1x8x16x4xf32> to vector<128x4xf32>
    %c8 = arith.constant 8 : index
    %c0_46 = arith.constant 0 : index
    %27 = vector.load %arg5[%c8, %c0_46] : memref<36x4xf32, #tpu.memory_space<vmem>>, vector<4x4xf32>
    %cst_47 = arith.constant dense<0.000000e+00> : vector<128x4xf32>
    %28 = tpu.matmul %26, %27, %cst_47 {dimension_numbers = #tpu.dot_dimension_numbers<[1], [0], [0], [1], [0, 0, 1, 1], [], []>} : vector<128x4xf32>, vector<4x4xf32>, vector<128x4xf32> -> vector<128x4xf32>
    %29 = arith.addf %24, %28 : vector<128x4xf32>
    %c0_48 = arith.constant 0 : index
    %c1_49 = arith.constant 1 : index
    %c0_50 = arith.constant 0 : index
    %c0_51 = arith.constant 0 : index
    %30 = vector.load %arg8[%c0_48, %c1_49, %c0_50, %c0_51] : memref<1x10x18x4xf32, #tpu.memory_space<vmem>>, vector<1x8x16x4xf32>
    %31 = vector.shape_cast %30 : vector<1x8x16x4xf32> to vector<128x4xf32>
    %c12 = arith.constant 12 : index
    %c0_52 = arith.constant 0 : index
    %32 = vector.load %arg5[%c12, %c0_52] : memref<36x4xf32, #tpu.memory_space<vmem>>, vector<4x4xf32>
    %cst_53 = arith.constant dense<0.000000e+00> : vector<128x4xf32>
    %33 = tpu.matmul %31, %32, %cst_53 {dimension_numbers = #tpu.dot_dimension_numbers<[1], [0], [0], [1], [0, 0, 1, 1], [], []>} : vector<128x4xf32>, vector<4x4xf32>, vector<128x4xf32> -> vector<128x4xf32>
    %34 = arith.addf %29, %33 : vector<128x4xf32>
    %c0_54 = arith.constant 0 : index
    %c1_55 = arith.constant 1 : index
    %c1_56 = arith.constant 1 : index
    %c0_57 = arith.constant 0 : index
    %35 = vector.load %arg8[%c0_54, %c1_55, %c1_56, %c0_57] : memref<1x10x18x4xf32, #tpu.memory_space<vmem>>, vector<1x8x16x4xf32>
    %36 = vector.shape_cast %35 : vector<1x8x16x4xf32> to vector<128x4xf32>
    %c16 = arith.constant 16 : index
    %c0_58 = arith.constant 0 : index
    %37 = vector.load %arg5[%c16, %c0_58] : memref<36x4xf32, #tpu.memory_space<vmem>>, vector<4x4xf32>
    %cst_59 = arith.constant dense<0.000000e+00> : vector<128x4xf32>
    %38 = tpu.matmul %36, %37, %cst_59 {dimension_numbers = #tpu.dot_dimension_numbers<[1], [0], [0], [1], [0, 0, 1, 1], [], []>} : vector<128x4xf32>, vector<4x4xf32>, vector<128x4xf32> -> vector<128x4xf32>
    %39 = arith.addf %34, %38 : vector<128x4xf32>
    %c0_60 = arith.constant 0 : index
    %c1_61 = arith.constant 1 : index
    %c2_62 = arith.constant 2 : index
    %c0_63 = arith.constant 0 : index
    %40 = vector.load %arg8[%c0_60, %c1_61, %c2_62, %c0_63] : memref<1x10x18x4xf32, #tpu.memory_space<vmem>>, vector<1x8x16x4xf32>
    %41 = vector.shape_cast %40 : vector<1x8x16x4xf32> to vector<128x4xf32>
    %c20 = arith.constant 20 : index
    %c0_64 = arith.constant 0 : index
    %42 = vector.load %arg5[%c20, %c0_64] : memref<36x4xf32, #tpu.memory_space<vmem>>, vector<4x4xf32>
    %cst_65 = arith.constant dense<0.000000e+00> : vector<128x4xf32>
    %43 = tpu.matmul %41, %42, %cst_65 {dimension_numbers = #tpu.dot_dimension_numbers<[1], [0], [0], [1], [0, 0, 1, 1], [], []>} : vector<128x4xf32>, vector<4x4xf32>, vector<128x4xf32> -> vector<128x4xf32>
    %44 = arith.addf %39, %43 : vector<128x4xf32>
    %c0_66 = arith.constant 0 : index
    %c2_67 = arith.constant 2 : index
    %c0_68 = arith.constant 0 : index
    %c0_69 = arith.constant 0 : index
    %45 = vector.load %arg8[%c0_66, %c2_67, %c0_68, %c0_69] : memref<1x10x18x4xf32, #tpu.memory_space<vmem>>, vector<1x8x16x4xf32>
    %46 = vector.shape_cast %45 : vector<1x8x16x4xf32> to vector<128x4xf32>
    %c24 = arith.constant 24 : index
    %c0_70 = arith.constant 0 : index
    %47 = vector.load %arg5[%c24, %c0_70] : memref<36x4xf32, #tpu.memory_space<vmem>>, vector<4x4xf32>
    %cst_71 = arith.constant dense<0.000000e+00> : vector<128x4xf32>
    %48 = tpu.matmul %46, %47, %cst_71 {dimension_numbers = #tpu.dot_dimension_numbers<[1], [0], [0], [1], [0, 0, 1, 1], [], []>} : vector<128x4xf32>, vector<4x4xf32>, vector<128x4xf32> -> vector<128x4xf32>
    %49 = arith.addf %44, %48 : vector<128x4xf32>
    %c0_72 = arith.constant 0 : index
    %c2_73 = arith.constant 2 : index
    %c1_74 = arith.constant 1 : index
    %c0_75 = arith.constant 0 : index
    %50 = vector.load %arg8[%c0_72, %c2_73, %c1_74, %c0_75] : memref<1x10x18x4xf32, #tpu.memory_space<vmem>>, vector<1x8x16x4xf32>
    %51 = vector.shape_cast %50 : vector<1x8x16x4xf32> to vector<128x4xf32>
    %c28 = arith.constant 28 : index
    %c0_76 = arith.constant 0 : index
    %52 = vector.load %arg5[%c28, %c0_76] : memref<36x4xf32, #tpu.memory_space<vmem>>, vector<4x4xf32>
    %cst_77 = arith.constant dense<0.000000e+00> : vector<128x4xf32>
    %53 = tpu.matmul %51, %52, %cst_77 {dimension_numbers = #tpu.dot_dimension_numbers<[1], [0], [0], [1], [0, 0, 1, 1], [], []>} : vector<128x4xf32>, vector<4x4xf32>, vector<128x4xf32> -> vector<128x4xf32>
    %54 = arith.addf %49, %53 : vector<128x4xf32>
    %c0_78 = arith.constant 0 : index
    %c2_79 = arith.constant 2 : index
    %c2_80 = arith.constant 2 : index
    %c0_81 = arith.constant 0 : index
    %55 = vector.load %arg8[%c0_78, %c2_79, %c2_80, %c0_81] : memref<1x10x18x4xf32, #tpu.memory_space<vmem>>, vector<1x8x16x4xf32>
    %56 = vector.shape_cast %55 : vector<1x8x16x4xf32> to vector<128x4xf32>
    %c32 = arith.constant 32 : index
    %c0_82 = arith.constant 0 : index
    %57 = vector.load %arg5[%c32, %c0_82] : memref<36x4xf32, #tpu.memory_space<vmem>>, vector<4x4xf32>
    %cst_83 = arith.constant dense<0.000000e+00> : vector<128x4xf32>
    %58 = tpu.matmul %56, %57, %cst_83 {dimension_numbers = #tpu.dot_dimension_numbers<[1], [0], [0], [1], [0, 0, 1, 1], [], []>} : vector<128x4xf32>, vector<4x4xf32>, vector<128x4xf32> -> vector<128x4xf32>
    %59 = arith.addf %54, %58 : vector<128x4xf32>
    %cst_84 = arith.constant dense<0.000000e+00> : vector<4xf32>
    %60 = vector.multi_reduction <add>, %59, %cst_84 [0] : vector<128x4xf32> to vector<4xf32>
    %cst_85 = arith.constant 7.812500e-03 : f32
    %61 = vector.broadcast %cst_85 : f32 to vector<4xf32>
    %62 = arith.mulf %60, %61 : vector<4xf32>
    %63 = vector.shape_cast %62 : vector<4xf32> to vector<1x4xf32>
    %64 = vector.broadcast %63 : vector<1x4xf32> to vector<128x4xf32>
    %65 = arith.subf %59, %64 : vector<128x4xf32>
    %66 = arith.mulf %65, %65 : vector<128x4xf32>
    %cst_86 = arith.constant dense<0.000000e+00> : vector<4xf32>
    %67 = vector.multi_reduction <add>, %66, %cst_86 [0] : vector<128x4xf32> to vector<4xf32>
    %68 = vector.shape_cast %60 : vector<4xf32> to vector<1x1x1x4xf32>
    %c0_87 = arith.constant 0 : index
    %c0_88 = arith.constant 0 : index
    %c0_89 = arith.constant 0 : index
    %c0_90 = arith.constant 0 : index
    %69 = vector.load %arg7[%c0_87, %c0_88, %c0_89, %c0_90] : memref<1x1x2x4xf32, #tpu.memory_space<vmem>>, vector<1x1x1x4xf32>
    tpu.vector_store %arg7[%c0_87, %c0_88, %c0_89, %c0_90], %68 {strides = array<i32>} : memref<1x1x2x4xf32, #tpu.memory_space<vmem>>, vector<1x1x1x4xf32>,
    %70 = vector.shape_cast %67 : vector<4xf32> to vector<1x1x1x4xf32>
    %c0_91 = arith.constant 0 : index
    %c0_92 = arith.constant 0 : index
    %c1_93 = arith.constant 1 : index
    %c0_94 = arith.constant 0 : index
    %71 = vector.load %arg7[%c0_91, %c0_92, %c1_93, %c0_94] : memref<1x1x2x4xf32, #tpu.memory_space<vmem>>, vector<1x1x1x4xf32>
    tpu.vector_store %arg7[%c0_91, %c0_92, %c1_93, %c0_94], %70 {strides = array<i32>} : memref<1x1x2x4xf32, #tpu.memory_space<vmem>>, vector<1x1x1x4xf32>,
    %72 = vector.shape_cast %59 : vector<128x4xf32> to vector<1x8x16x4xf32>
    %c0_95 = arith.constant 0 : index
    %c0_96 = arith.constant 0 : index
    %c0_97 = arith.constant 0 : index
    %c0_98 = arith.constant 0 : index
    %73 = vector.load %arg6[%c0_95, %c0_96, %c0_97, %c0_98] : memref<1x8x16x4xf32, #tpu.memory_space<vmem>>, vector<1x8x16x4xf32>
    tpu.vector_store %arg6[%c0_95, %c0_96, %c0_97, %c0_98], %72 {strides = array<i32>} : memref<1x8x16x4xf32, #tpu.memory_space<vmem>>, vector<1x8x16x4xf32>,
    return
  }
  func.func @transform_0(%arg0: i32, %arg1: i32) -> (i32, i32, i32, i32) {
    %c0_i32 = arith.constant 0 : i32
    %c0_i32_0 = arith.constant 0 : i32
    %c0_i32_1 = arith.constant 0 : i32
    return %arg0, %arg1, %c0_i32, %c0_i32_0 : i32, i32, i32, i32
  }
  func.func @transform_1(%arg0: i32, %arg1: i32) -> (i32, i32, i32, i32) {
    %c8_i32 = arith.constant 8 : i32
    %0 = arith.muli %arg1, %c8_i32 : i32
    %c1_i32 = arith.constant 1 : i32
    %1 = arith.subi %0, %c1_i32 : i32
    %c0_i32 = arith.constant 0 : i32
    %2 = arith.maxsi %1, %c0_i32 : i32
    %c0_i32_0 = arith.constant 0 : i32
    %c0_i32_1 = arith.constant 0 : i32
    %c0_i32_2 = arith.constant 0 : i32
    return %arg0, %2, %c0_i32_0, %c0_i32_1 : i32, i32, i32, i32
  }
  func.func @transform_2(%arg0: i32, %arg1: i32) -> (i32, i32, i32, i32) {
    %c8_i32 = arith.constant 8 : i32
    %0 = arith.muli %arg1, %c8_i32 : i32
    %c8_i32_0 = arith.constant 8 : i32
    %1 = arith.addi %0, %c8_i32_0 : i32
    %c15_i32 = arith.constant 15 : i32
    %2 = arith.minsi %1, %c15_i32 : i32
    %c0_i32 = arith.constant 0 : i32
    %c0_i32_1 = arith.constant 0 : i32
    %c0_i32_2 = arith.constant 0 : i32
    return %arg0, %2, %c0_i32, %c0_i32_1 : i32, i32, i32, i32
  }
  func.func @transform_3(%arg0: i32, %arg1: i32) -> (i32, i32) {
    %c0_i32 = arith.constant 0 : i32
    %c0_i32_0 = arith.constant 0 : i32
    %c0_i32_1 = arith.constant 0 : i32
    return %c0_i32, %c0_i32_0 : i32, i32
  }
  func.func @transform_4(%arg0: i32, %arg1: i32) -> (i32, i32, i32, i32) {
    %c0_i32 = arith.constant 0 : i32
    %c0_i32_0 = arith.constant 0 : i32
    %c0_i32_1 = arith.constant 0 : i32
    return %arg0, %arg1, %c0_i32, %c0_i32_0 : i32, i32, i32, i32
  }
  func.func @transform_5(%arg0: i32, %arg1: i32) -> (i32, i32, i32, i32) {
    %c0_i32 = arith.constant 0 : i32
    %c0_i32_0 = arith.constant 0 : i32
    %c0_i32_1 = arith.constant 0 : i32
    return %arg0, %arg1, %c0_i32, %c0_i32_0 : i32, i32, i32, i32
  }
}

</mosaic_0001>

<llo_original>
// kernel: tpu_custom_call.1
$region0: #{tpu_custom_call.1}
  #allocation0 [shape = 'u32[]', space=smem, size = 0x4, offset = 0x4, fixed_abs, tag = 'smem constant byte address 0x4 - core index']
  #allocation1 [shape = 'u32[72,128]{1,0:T(1,128)}', space=vmem, size = 0x9000, scoped, tag = 'internal scratch']
  #allocation2 [shape = 'f32[1,10,18,4]{3,2,1,0:T(8,128)}', space=vmem, size = 0x1e000, scoped, tag = 'scratch operand']
  %s0 = inlined_call_operand.vmem [shape: f32[2,16,16,4], index: 0, kind: input, shape index: {}]
  %s1 = inlined_call_operand.vmem [shape: f32[2,16,16,4], index: 1, kind: input, shape index: {}]
  %s2 = inlined_call_operand.vmem [shape: f32[2,16,16,4], index: 2, kind: input, shape index: {}]
  %s3 = inlined_call_operand.vmem [shape: f32[36,4], index: 3, kind: input, shape index: {}]
  %s4 = inlined_call_operand.vmem [shape: f32[2,16,16,4], index: 4, kind: output, shape index: {0}]
  %s5 = inlined_call_operand.hbm [shape: f32[2,2,2,4], index: 5, kind: output, shape index: {1}]
  %6 = xla_tuple %s4, %s5
  %s7 = sld [smem:[#allocation0]]
  $region57: #{tpu_custom_call.1} parent=0
    _
  %s9 = ssub.s32 1, %s7
  %s10 = scalar_select 0, %s9, %s7
  $region1: #{tpu_custom_call.1} parent=0
    #allocation3 [shape = 'u8[2048]{0}', space=vmem, size = 0x800, scoped, tag = 'output window, operand 1']
    #allocation4 [shape = 's32[2]{0}', space=sflag, size = 0x8, scoped, tag = 'scoped memory for tpu_custom_call.1']
    %11 = vsyncpa [#allocation4], 0
    %s12 = scalar_lea.sflag [#allocation4], 1
    %13 = vsyncpa %s12, 0
    loop: start=0, step=1, limit=6
    $region2: #{tpu_custom_call.1} parent=1 // loop_pre_header
      _
    $region3: #{tpu_custom_call.1} parent=1 // loop_header
      %s15 = sphi 0, %s19
      %p16 = scmp.ge.s32.totalorder %s15, 6
      %s22 = sphi 0, %s34
      %s23 = sphi 0, %s30
      %s24 = sphi 0, %s22
      %s25 = sphi 0, %s23
      %s26 = sphi 0, %s24
      %s27 = sphi 0, %s25
      %s39 = sphi 0, %s41
      %s42 = sphi 0, %s39
      %s43 = sphi 0, %s42
      %s59 = sphi 0, %s43
      %s75 = sphi 0, %s77
      %s78 = sphi 0, %s75
      %s79 = sphi 0, %s78
      %s95 = sphi 0, %s79
      %s111 = sphi 0, %s113
      %s114 = sphi 0, %s111
      %s115 = sphi 0, %s114
      %s131 = sphi 0, %s115
      %s135 = sphi 0, %s135
      %s137 = sphi 0, %s135
      %s138 = sphi 0, %s137
      %s152 = sphi 0, %s138
      %s160 = sphi 0, %s162
      %s163 = sphi 0, %s160
      %s164 = sphi 0, %s163
      %s180 = sphi 0, %s164
      %s188 = sphi 0, %s190
      %s191 = sphi 0, %s188
      %s192 = sphi 0, %s191
      %s208 = sphi 0, %s192
    $region4: #{tpu_custom_call.1} parent=1 // loop_header_branch
      %18 = sbr.rel (%p16) target = $region8
    $region5: #{tpu_custom_call.1} parent=1 // loop_body
      %s20 = ssub.s32 %s15, 1
      %s21 = ssub.s32 %s15, 2
      %s28 = sadd.s32 1, %s23
      %p29 = scmp.ge.s32.totalorder %s28, 2
      %s30 = scalar_select %p29, 0, %s28
      %s31 = sadd.s32 1, %s22
      %s32 = scalar_select %p29, %s31, %s22
      %p33 = scmp.ge.s32.totalorder %s32, 2
      %s34 = scalar_select %p33, 0, %s32
      %s35 = ssub.s32 %s22, %s34
      %s36 = ssub.s32 %s23, %s30
      %s37 = sor.u32 %s35, %s36
      %p38 = scmp.eq.s32.totalorder %s37, 0
      %s40 = sadd.s32 %s39, 1
      %s41 = scalar_select %p38, %s39, %s40
      %p44 = pneg %p38
      %p45 = scmp.eq.s32.totalorder %s15, 3
      %p46 = por %p44, %p45
      %p47 = scmp.ne.s32.totalorder %s39, %s42
      %p48 = scmp.eq.s32.totalorder %s15, 0
      %p49 = por %p47, %p48
      %p50 = scmp.ne.s32.totalorder %s39, %s42
      %p51 = scmp.eq.s32.totalorder %s20, 3
      %p52 = por %p50, %p51
      %p53 = scmp.ne.s32.totalorder %s42, %s43
      %p54 = scmp.eq.s32.totalorder %s20, 0
      %p55 = por %p53, %p54
      %p56 = scmp.ne.s32.totalorder %s42, %s43
      %p57 = scmp.eq.s32.totalorder %s21, 3
      %p58 = por %p56, %p57
      %p60 = scmp.ne.s32.totalorder %s43, %s59
      %p61 = scmp.eq.s32.totalorder %s21, 0
      %p62 = por %p60, %p61
      %s63 = smul.u32 %s23, 8
      %s64 = ssub.s32 %s63, 1
      %p65 = scmp.gt.s32.totalorder %s64, 0
      %s66 = scalar_select %p65, %s64, 0
      %s67 = smul.u32 %s30, 8
      %s68 = ssub.s32 %s67, 1
      %p69 = scmp.gt.s32.totalorder %s68, 0
      %s70 = scalar_select %p69, %s68, 0
      %s71 = ssub.s32 %s22, %s34
      %s72 = ssub.s32 %s66, %s70
      %s73 = sor.u32 %s71, %s72
      %p74 = scmp.eq.s32.totalorder %s73, 0
      %s76 = sadd.s32 %s75, 1
      %s77 = scalar_select %p74, %s75, %s76
      %p80 = pneg %p74
      %p81 = scmp.eq.s32.totalorder %s15, 3
      %p82 = por %p80, %p81
      %p83 = scmp.ne.s32.totalorder %s75, %s78
      %p84 = scmp.eq.s32.totalorder %s15, 0
      %p85 = por %p83, %p84
      %p86 = scmp.ne.s32.totalorder %s75, %s78
      %p87 = scmp.eq.s32.totalorder %s20, 3
      %p88 = por %p86, %p87
      %p89 = scmp.ne.s32.totalorder %s78, %s79
      %p90 = scmp.eq.s32.totalorder %s20, 0
      %p91 = por %p89, %p90
      %p92 = scmp.ne.s32.totalorder %s78, %s79
      %p93 = scmp.eq.s32.totalorder %s21, 3
      %p94 = por %p92, %p93
      %p96 = scmp.ne.s32.totalorder %s79, %s95
      %p97 = scmp.eq.s32.totalorder %s21, 0
      %p98 = por %p96, %p97
      %s99 = smul.u32 %s23, 8
      %s100 = sadd.s32 %s99, 8
      %p101 = scmp.lt.s32.totalorder %s100, 15
      %s102 = scalar_select %p101, %s100, 15
      %s103 = smul.u32 %s30, 8
      %s104 = sadd.s32 %s103, 8
      %p105 = scmp.lt.s32.totalorder %s104, 15
      %s106 = scalar_select %p105, %s104, 15
      %s107 = ssub.s32 %s22, %s34
      %s108 = ssub.s32 %s102, %s106
      %s109 = sor.u32 %s107, %s108
      %p110 = scmp.eq.s32.totalorder %s109, 0
      %s112 = sadd.s32 %s111, 1
      %s113 = scalar_select %p110, %s111, %s112
      %p116 = pneg %p110
      %p117 = scmp.eq.s32.totalorder %s15, 3
      %p118 = por %p116, %p117
      %p119 = scmp.ne.s32.totalorder %s111, %s114
      %p120 = scmp.eq.s32.totalorder %s15, 0
      %p121 = por %p119, %p120
      %p122 = scmp.ne.s32.totalorder %s111, %s114
      %p123 = scmp.eq.s32.totalorder %s20, 3
      %p124 = por %p122, %p123
      %p125 = scmp.ne.s32.totalorder %s114, %s115
      %p126 = scmp.eq.s32.totalorder %s20, 0
      %p127 = por %p125, %p126
      %p128 = scmp.ne.s32.totalorder %s114, %s115
      %p129 = scmp.eq.s32.totalorder %s21, 3
      %p130 = por %p128, %p129
      %p132 = scmp.ne.s32.totalorder %s115, %s131
      %p133 = scmp.eq.s32.totalorder %s21, 0
      %p134 = por %p132, %p133
      %s136 = sadd.s32 %s135, 1
      %p139 = scmp.eq.s32.totalorder %s15, 3
      %p140 = scmp.ne.s32.totalorder %s135, %s137
      %p141 = scmp.eq.s32.totalorder %s15, 0
      %p142 = por %p140, %p141
      %p143 = scmp.ne.s32.totalorder %s135, %s137
      %p144 = scmp.eq.s32.totalorder %s20, 3
      %p145 = por %p143, %p144
      %p146 = scmp.ne.s32.totalorder %s137, %s138
      %p147 = scmp.eq.s32.totalorder %s20, 0
      %p148 = por %p146, %p147
      %p149 = scmp.ne.s32.totalorder %s137, %s138
      %p150 = scmp.eq.s32.totalorder %s21, 3
      %p151 = por %p149, %p150
      %p153 = scmp.ne.s32.totalorder %s138, %s152
      %p154 = scmp.eq.s32.totalorder %s21, 0
      %p155 = por %p153, %p154
      %s156 = ssub.s32 %s22, %s34
      %s157 = ssub.s32 %s23, %s30
      %s158 = sor.u32 %s156, %s157
      %p159 = scmp.eq.s32.totalorder %s158, 0
      %s161 = sadd.s32 %s160, 1
      %s162 = scalar_select %p159, %s160, %s161
      %p165 = pneg %p159
      %p166 = scmp.eq.s32.totalorder %s15, 3
      %p167 = por %p165, %p166
      %p168 = scmp.ne.s32.totalorder %s160, %s163
      %p169 = scmp.eq.s32.totalorder %s15, 0
      %p170 = por %p168, %p169
      %p171 = scmp.ne.s32.totalorder %s160, %s163
      %p172 = scmp.eq.s32.totalorder %s20, 3
      %p173 = por %p171, %p172
      %p174 = scmp.ne.s32.totalorder %s163, %s164
      %p175 = scmp.eq.s32.totalorder %s20, 0
      %p176 = por %p174, %p175
      %p177 = scmp.ne.s32.totalorder %s163, %s164
      %p178 = scmp.eq.s32.totalorder %s21, 3
      %p179 = por %p177, %p178
      %p181 = scmp.ne.s32.totalorder %s164, %s180
      %p182 = scmp.eq.s32.totalorder %s21, 0
      %p183 = por %p181, %p182
      %s184 = ssub.s32 %s22, %s34
      %s185 = ssub.s32 %s23, %s30
      %s186 = sor.u32 %s184, %s185
      %p187 = scmp.eq.s32.totalorder %s186, 0
      %s189 = sadd.s32 %s188, 1
      %s190 = scalar_select %p187, %s188, %s189
      %p193 = pneg %p187
      %p194 = scmp.eq.s32.totalorder %s15, 3
      %p195 = por %p193, %p194
      %p196 = scmp.ne.s32.totalorder %s188, %s191
      %p197 = scmp.eq.s32.totalorder %s15, 0
      %p198 = por %p196, %p197
      %p199 = scmp.ne.s32.totalorder %s188, %s191
      %p200 = scmp.eq.s32.totalorder %s20, 3
      %p201 = por %p199, %p200
      %p202 = scmp.ne.s32.totalorder %s191, %s192
      %p203 = scmp.eq.s32.totalorder %s20, 0
      %p204 = por %p202, %p203
      %p205 = scmp.ne.s32.totalorder %s191, %s192
      %p206 = scmp.eq.s32.totalorder %s21, 3
      %p207 = por %p205, %p206
      %p209 = scmp.ne.s32.totalorder %s192, %s208
      %p210 = scmp.eq.s32.totalorder %s21, 0
      %p211 = por %p209, %p210
      %p212 = scmp.le.s32.totalorder 1, %s15
      %p213 = scmp.lt.s32.totalorder %s15, 5
      %p214 = pnand %p212, %p213
      %p215 = pneg %p214
      // Predicated region
      $region9: #{tpu_custom_call.1} parent=5 // pred_check
        _
      $region10: #{tpu_custom_call.1} parent=5 // pred_check_branch
        %217 = sbr.rel (%p214) target = $region12
      $region11: #{tpu_custom_call.1} parent=5 // pred_region
        %s218 = ssub.s32 %s15, 1
        // Predicated region
        $region13: #{tpu_custom_call.1} parent=11 // pred_check
          %p219 = pneg %p148
        $region14: #{tpu_custom_call.1} parent=11 // pred_check_branch
          %221 = sbr.rel (%p219) target = $region16
        $region15: #{tpu_custom_call.1} parent=11 // pred_region
          _
        $region16: #{tpu_custom_call.1} parent=11 // pred_fallthru
          _
      $region12: #{tpu_custom_call.1} parent=5 // pred_fallthru
        _
      %p222 = scmp.lt.s32.totalorder %s15, 4
      // Predicated region
      $region17: #{tpu_custom_call.1} parent=5 // pred_check
        %p223 = pneg %p222
      $region18: #{tpu_custom_call.1} parent=5 // pred_check_branch
        %225 = sbr.rel (%p223) target = $region20
      $region19: #{tpu_custom_call.1} parent=5 // pred_region
        // Predicated region
        $region21: #{tpu_custom_call.1} parent=19 // pred_check
          %p226 = pneg %p49
        $region22: #{tpu_custom_call.1} parent=19 // pred_check_branch
          %228 = sbr.rel (%p226) target = $region24
        $region23: #{tpu_custom_call.1} parent=19 // pred_region
          %s229 = smul.u32 8, %s23
          %p230 = scmp.lt.s32.totalorder %s22, 1
          %s231 = scalar_select %p230, %s22, 1
          %p232 = scmp.lt.s32.totalorder %s229, 15
          %s233 = scalar_select %p232, %s229, 15
          %s234 = smul.addr %s233, 2
          %s235 = smul.addr %s231, 32
          %s236 = sadd.s32 %s234, %s235
          %s237 = smul.addr %s236, 8
          %s238 = scalar_lea.vmem %s0, %s237
          %s239 = smul.u32 8, %s23
        $region24: #{tpu_custom_call.1} parent=19 // pred_fallthru
          _
        // Predicated region
        $region25: #{tpu_custom_call.1} parent=19 // pred_check
          %p240 = pneg %p85
        $region26: #{tpu_custom_call.1} parent=19 // pred_check_branch
          %242 = sbr.rel (%p240) target = $region28
        $region27: #{tpu_custom_call.1} parent=19 // pred_region
          %s243 = smul.u32 %s23, 8
          %s244 = ssub.s32 %s243, 1
          %p245 = scmp.gt.s32.totalorder %s244, 0
          %s246 = scalar_select %p245, %s244, 0
          %p247 = scmp.lt.s32.totalorder %s22, 1
          %s248 = scalar_select %p247, %s22, 1
          %p249 = scmp.lt.s32.totalorder %s246, 15
          %s250 = scalar_select %p249, %s246, 15
          %s251 = smul.addr %s250, 2
          %s252 = smul.addr %s248, 32
          %s253 = sadd.s32 %s251, %s252
          %s254 = smul.addr %s253, 8
          %s255 = scalar_lea.vmem %s1, %s254
          %s256 = smul.u32 %s23, 8
          %s257 = ssub.s32 %s256, 1
          %p258 = scmp.gt.s32.totalorder %s257, 0
          %s259 = scalar_select %p258, %s257, 0
        $region28: #{tpu_custom_call.1} parent=19 // pred_fallthru
          _
        // Predicated region
        $region29: #{tpu_custom_call.1} parent=19 // pred_check
          %p260 = pneg %p121
        $region30: #{tpu_custom_call.1} parent=19 // pred_check_branch
          %262 = sbr.rel (%p260) target = $region32
        $region31: #{tpu_custom_call.1} parent=19 // pred_region
          %s263 = smul.u32 %s23, 8
          %s264 = sadd.s32 %s263, 8
          %p265 = scmp.lt.s32.totalorder %s264, 15
          %s266 = scalar_select %p265, %s264, 15
          %p267 = scmp.lt.s32.totalorder %s22, 1
          %s268 = scalar_select %p267, %s22, 1
          %p269 = scmp.lt.s32.totalorder %s266, 15
          %s270 = scalar_select %p269, %s266, 15
          %s271 = smul.addr %s270, 2
          %s272 = smul.addr %s268, 32
          %s273 = sadd.s32 %s271, %s272
          %s274 = smul.addr %s273, 8
          %s275 = scalar_lea.vmem %s2, %s274
          %s276 = smul.u32 %s23, 8
          %s277 = sadd.s32 %s276, 8
          %p278 = scmp.lt.s32.totalorder %s277, 15
          %s279 = scalar_select %p278, %s277, 15
        $region32: #{tpu_custom_call.1} parent=19 // pred_fallthru
          _
      $region20: #{tpu_custom_call.1} parent=5 // pred_fallthru
        _
      %p280 = scmp.le.s32.totalorder 1, %s15
      %p281 = scmp.lt.s32.totalorder %s15, 5
      %p282 = pnand %p280, %p281
      %p283 = pneg %p282
      // Predicated region
      $region33: #{tpu_custom_call.1} parent=5 // pred_check
        _
      $region34: #{tpu_custom_call.1} parent=5 // pred_check_branch
        %285 = sbr.rel (%p282) target = $region36
      $region35: #{tpu_custom_call.1} parent=5 // pred_region
        %s286 = ssub.s32 %s15, 1
        %s287 = smul.u32 8, %s25
        %p288 = scmp.lt.s32.totalorder %s24, 1
        %s289 = scalar_select %p288, %s24, 1
        %p290 = scmp.lt.s32.totalorder %s287, 15
        %s291 = scalar_select %p290, %s287, 15
        %s292 = smul.addr %s291, 2
        %s293 = smul.addr %s289, 32
        %s294 = sadd.s32 %s292, %s293
        %s295 = smul.addr %s294, 8
        %s296 = scalar_lea.vmem %s0, %s295
        %p297 = pneg %p55
        %p298 = pneg %p52
        %s299 = smul.u32 %s25, 8
        %s300 = ssub.s32 %s299, 1
        %p301 = scmp.gt.s32.totalorder %s300, 0
        %s302 = scalar_select %p301, %s300, 0
        %p303 = scmp.lt.s32.totalorder %s24, 1
        %s304 = scalar_select %p303, %s24, 1
        %p305 = scmp.lt.s32.totalorder %s302, 15
        %s306 = scalar_select %p305, %s302, 15
        %s307 = smul.addr %s306, 2
        %s308 = smul.addr %s304, 32
        %s309 = sadd.s32 %s307, %s308
        %s310 = smul.addr %s309, 8
        %s311 = scalar_lea.vmem %s1, %s310
        %p312 = pneg %p91
        %p313 = pneg %p88
        %s314 = smul.u32 %s25, 8
        %s315 = sadd.s32 %s314, 8
        %p316 = scmp.lt.s32.totalorder %s315, 15
        %s317 = scalar_select %p316, %s315, 15
        %p318 = scmp.lt.s32.totalorder %s24, 1
        %s319 = scalar_select %p318, %s24, 1
        %p320 = scmp.lt.s32.totalorder %s317, 15
        %s321 = scalar_select %p320, %s317, 15
        %s322 = smul.addr %s321, 2
        %s323 = smul.addr %s319, 32
        %s324 = sadd.s32 %s322, %s323
        %s325 = smul.addr %s324, 8
        %s326 = scalar_lea.vmem %s2, %s325
        %p327 = pneg %p127
        %p328 = pneg %p124
        %p329 = pneg %p148
        %p330 = pneg %p145
        %p331 = pneg %p176
        %p332 = pneg %p173
        %s333 = smul.u32 8, %s25
        %p334 = scmp.lt.s32.totalorder %s24, 1
        %s335 = scalar_select %p334, %s24, 1
        %p336 = scmp.lt.s32.totalorder %s333, 15
        %s337 = scalar_select %p336, %s333, 15
        %s338 = smul.addr %s337, 2
        %s339 = smul.addr %s335, 32
        %s340 = sadd.s32 %s338, %s339
        %s341 = smul.addr %s340, 8
        %s342 = scalar_lea.vmem %s4, %s341
        %p343 = pneg %p204
        %p344 = pneg %p201
        %s345 = sand.u32 %s191, 1
        %s346 = scalar_lea.sflag [#allocation4], %s345
        %s347 = sand.u32 %s191, 1
        %s348 = smul.addr %s347, 2
        %s349 = scalar_lea.vmem [#allocation3], %s348
        %s350 = smul.u32 8, %s25
        %p351 = scmp.lt.s32.totalorder %s24, 1
        %s352 = scalar_select %p351, %s24, 1
        %p353 = scmp.lt.s32.totalorder %s350, 15
        %s354 = scalar_select %p353, %s350, 15
        %s355 = smul.addr %s354, 2
        %s356 = smul.addr %s352, 32
        %s357 = sadd.s32 %s355, %s356
        %s358 = smul.addr %s357, 8
        %s359 = scalar_lea.vmem %s0, %s358
        %s360 = smul.u32 8, %s25
        %s361 = smul.u32 %s25, 8
        %s362 = ssub.s32 %s361, 1
        %p363 = scmp.gt.s32.totalorder %s362, 0
        %s364 = scalar_select %p363, %s362, 0
        %p365 = scmp.lt.s32.totalorder %s24, 1
        %s366 = scalar_select %p365, %s24, 1
        %p367 = scmp.lt.s32.totalorder %s364, 15
        %s368 = scalar_select %p367, %s364, 15
        %s369 = smul.addr %s368, 2
        %s370 = smul.addr %s366, 32
        %s371 = sadd.s32 %s369, %s370
        %s372 = smul.addr %s371, 8
        %s373 = scalar_lea.vmem %s1, %s372
        %s374 = smul.u32 %s25, 8
        %s375 = ssub.s32 %s374, 1
        %p376 = scmp.gt.s32.totalorder %s375, 0
        %s377 = scalar_select %p376, %s375, 0
        %s378 = smul.u32 %s25, 8
        %s379 = sadd.s32 %s378, 8
        %p380 = scmp.lt.s32.totalorder %s379, 15
        %s381 = scalar_select %p380, %s379, 15
        %p382 = scmp.lt.s32.totalorder %s24, 1
        %s383 = scalar_select %p382, %s24, 1
        %p384 = scmp.lt.s32.totalorder %s381, 15
        %s385 = scalar_select %p384, %s381, 15
        %s386 = smul.addr %s385, 2
        %s387 = smul.addr %s383, 32
        %s388 = sadd.s32 %s386, %s387
        %s389 = smul.addr %s388, 8
        %s390 = scalar_lea.vmem %s2, %s389
        %s391 = smul.u32 %s25, 8
        %s392 = sadd.s32 %s391, 8
        %p393 = scmp.lt.s32.totalorder %s392, 15
        %s394 = scalar_select %p393, %s392, 15
        %s395 = smul.u32 8, %s25
        %p396 = scmp.lt.s32.totalorder %s24, 1
        %s397 = scalar_select %p396, %s24, 1
        %p398 = scmp.lt.s32.totalorder %s395, 15
        %s399 = scalar_select %p398, %s395, 15
        %s400 = smul.addr %s399, 2
        %s401 = smul.addr %s397, 32
        %s402 = sadd.s32 %s400, %s401
        %s403 = smul.addr %s402, 8
        %s404 = scalar_lea.vmem %s4, %s403
        %s405 = smul.u32 8, %s25
        %v406 = vld [vmem:[%s359] sm:$0xff]
        %v407 = vld [vmem:[%s359 + $0x8] sm:$0xff]
        %v408 = vld [vmem:[%s359 + $0x10] sm:$0xff]
        %v409 = vld [vmem:[%s359 + $0x18] sm:$0xff]
        %v410 = vld [vmem:[%s359 + $0x20] sm:$0xff]
        %v411 = vld [vmem:[%s359 + $0x28] sm:$0xff]
        %v412 = vld [vmem:[%s359 + $0x30] sm:$0xff]
        %v413 = vld [vmem:[%s359 + $0x38] sm:$0xff]
        %v414 = vld [vmem:[%s359 + $0x40] sm:$0xff]
        %v415 = vld [vmem:[%s359 + $0x48] sm:$0xff]
        %v416 = vld [vmem:[%s359 + $0x50] sm:$0xff]
        %v417 = vld [vmem:[%s359 + $0x58] sm:$0xff]
        %v418 = vld [vmem:[%s359 + $0x60] sm:$0xff]
        %v419 = vld [vmem:[%s359 + $0x68] sm:$0xff]
        %v420 = vld [vmem:[%s359 + $0x70] sm:$0xff]
        %v421 = vld [vmem:[%s359 + $0x78] sm:$0xff]
        %v422 = vld [vmem:[%s373] sm:$0xff]
        %v423 = vld [vmem:[%s373 + $0x8] sm:$0xff]
        %v424 = vld [vmem:[%s390] sm:$0xff]
        %v425 = vld [vmem:[%s390 + $0x8] sm:$0xff]
        %vm426 = vcmask 24576
        %427 = vst.msk [vmem:[#allocation2] sm:$0x1] %vm426, 0.0
        %428 = vst.msk [vmem:[#allocation2 + $0x18] sm:$0x1] %vm426, 0.0
        %429 = vst.msk [vmem:[#allocation2 + $0x30] sm:$0x1] %vm426, 0.0
        %430 = vst.msk [vmem:[#allocation2 + $0x48] sm:$0x1] %vm426, 0.0
        %431 = vst.msk [vmem:[#allocation2 + $0x60] sm:$0x1] %vm426, 0.0
        %432 = vst.msk [vmem:[#allocation2 + $0x78] sm:$0x1] %vm426, 0.0
        %433 = vst.msk [vmem:[#allocation2 + $0x90] sm:$0x1] %vm426, 0.0
        %434 = vst.msk [vmem:[#allocation2 + $0xa8] sm:$0x1] %vm426, 0.0
        %435 = vst.msk [vmem:[#allocation2 + $0xc0] sm:$0x1] %vm426, 0.0
        %436 = vst.msk [vmem:[#allocation2 + $0xd8] sm:$0x1] %vm426, 0.0
        %437 = vst.msk [vmem:[#allocation2 + $0x11] sm:$0x1] %vm426, 0.0
        %438 = vst.msk [vmem:[#allocation2 + $0x29] sm:$0x1] %vm426, 0.0
        %439 = vst.msk [vmem:[#allocation2 + $0x41] sm:$0x1] %vm426, 0.0
        %440 = vst.msk [vmem:[#allocation2 + $0x59] sm:$0x1] %vm426, 0.0
        %441 = vst.msk [vmem:[#allocation2 + $0x71] sm:$0x1] %vm426, 0.0
        %442 = vst.msk [vmem:[#allocation2 + $0x89] sm:$0x1] %vm426, 0.0
        %443 = vst.msk [vmem:[#allocation2 + $0xa1] sm:$0x1] %vm426, 0.0
        %444 = vst.msk [vmem:[#allocation2 + $0xb9] sm:$0x1] %vm426, 0.0
        %445 = vst.msk [vmem:[#allocation2 + $0xd1] sm:$0x1] %vm426, 0.0
        %446 = vst.msk [vmem:[#allocation2 + $0xe9] sm:$0x1] %vm426, 0.0
        %s447 = scalar_lea.vmem [#allocation2], 24
        %vm448 = vcmask 31744
        %449 = vst.msk [vmem:[%s447 + $0x1] sm:$0xff] %vm448, %v406
        %450 = vst.msk [vmem:[%s447 + $0x9] sm:$0xff] %vm448, %v407
        %451 = vst.msk [vmem:[%s447 + $0x19] sm:$0xff] %vm448, %v408
        %452 = vst.msk [vmem:[%s447 + $0x21] sm:$0xff] %vm448, %v409
        %453 = vst.msk [vmem:[%s447 + $0x31] sm:$0xff] %vm448, %v410
        %454 = vst.msk [vmem:[%s447 + $0x39] sm:$0xff] %vm448, %v411
        %455 = vst.msk [vmem:[%s447 + $0x49] sm:$0xff] %vm448, %v412
        %456 = vst.msk [vmem:[%s447 + $0x51] sm:$0xff] %vm448, %v413
        %457 = vst.msk [vmem:[%s447 + $0x61] sm:$0xff] %vm448, %v414
        %458 = vst.msk [vmem:[%s447 + $0x69] sm:$0xff] %vm448, %v415
        %459 = vst.msk [vmem:[%s447 + $0x79] sm:$0xff] %vm448, %v416
        %460 = vst.msk [vmem:[%s447 + $0x81] sm:$0xff] %vm448, %v417
        %461 = vst.msk [vmem:[%s447 + $0x91] sm:$0xff] %vm448, %v418
        %462 = vst.msk [vmem:[%s447 + $0x99] sm:$0xff] %vm448, %v419
        %463 = vst.msk [vmem:[%s447 + $0xa9] sm:$0xff] %vm448, %v420
        %464 = vst.msk [vmem:[%s447 + $0xb1] sm:$0xff] %vm448, %v421
        %p465 = scmp.eq.s32.totalorder %s25, 0
        %s466 = scalar_select %p465, 1, 0
        %v467 = vstv %s466
        %vm468 = vcmp.eq.s32.totalorder %v467, 1
        %v469 = vsel %vm468, 0.0, %v422
        %v470 = vsel %vm468, 0.0, %v423
        %471 = vst.msk [vmem:[#allocation2 + $0x1] sm:$0xff] %vm448, %v469
        %472 = vst.msk [vmem:[#allocation2 + $0x9] sm:$0xff] %vm448, %v470
        %p473 = scmp.eq.s32.totalorder %s25, 1
        %s474 = scalar_select %p473, 1, 0
        %v475 = vstv %s474
        %vm476 = vcmp.eq.s32.totalorder %v475, 1
        %v477 = vsel %vm476, 0.0, %v424
        %v478 = vsel %vm476, 0.0, %v425
        %s479 = scalar_lea.vmem [#allocation2], 216
        %480 = vst.msk [vmem:[%s479 + $0x1] sm:$0xff] %vm448, %v477
        %481 = vst.msk [vmem:[%s479 + $0x9] sm:$0xff] %vm448, %v478
        %v482 = vld [vmem:[#allocation2] sm:$0xff]
        %v483 = vld [vmem:[#allocation2 + $0x8] sm:$0xff]
        %v484 = vld [vmem:[#allocation2 + $0x18] sm:$0xff]
        %v485 = vld [vmem:[#allocation2 + $0x20] sm:$0xff]
        %v486 = vld [vmem:[#allocation2 + $0x30] sm:$0xff]
        %v487 = vld [vmem:[#allocation2 + $0x38] sm:$0xff]
        %v488 = vld [vmem:[#allocation2 + $0x48] sm:$0xff]
        %v489 = vld [vmem:[#allocation2 + $0x50] sm:$0xff]
        %v490 = vld [vmem:[#allocation2 + $0x60] sm:$0xff]
        %v491 = vld [vmem:[#allocation2 + $0x68] sm:$0xff]
        %v492 = vld [vmem:[#allocation2 + $0x78] sm:$0xff]
        %v493 = vld [vmem:[#allocation2 + $0x80] sm:$0xff]
        %v494 = vld [vmem:[#allocation2 + $0x90] sm:$0xff]
        %v495 = vld [vmem:[#allocation2 + $0x98] sm:$0xff]
        %v496 = vld [vmem:[#allocation2 + $0xa8] sm:$0xff]
        %v497 = vld [vmem:[#allocation2 + $0xb0] sm:$0xff]
        %v498 = vld [vmem:[%s3] sm:$0xf]
        %v499 = vld [vmem:[#allocation2 + $0x1] sm:$0xff]
        %v500 = vld [vmem:[#allocation2 + $0x9] sm:$0xff]
        %v501 = vld [vmem:[#allocation2 + $0x19] sm:$0xff]
        %v502 = vld [vmem:[#allocation2 + $0x21] sm:$0xff]
        %v503 = vld [vmem:[#allocation2 + $0x31] sm:$0xff]
        %v504 = vld [vmem:[#allocation2 + $0x39] sm:$0xff]
        %v505 = vld [vmem:[#allocation2 + $0x49] sm:$0xff]
        %v506 = vld [vmem:[#allocation2 + $0x51] sm:$0xff]
        %v507 = vld [vmem:[#allocation2 + $0x61] sm:$0xff]
        %v508 = vld [vmem:[#allocation2 + $0x69] sm:$0xff]
        %v509 = vld [vmem:[#allocation2 + $0x79] sm:$0xff]
        %v510 = vld [vmem:[#allocation2 + $0x81] sm:$0xff]
        %v511 = vld [vmem:[#allocation2 + $0x91] sm:$0xff]
        %v512 = vld [vmem:[#allocation2 + $0x99] sm:$0xff]
        %v513 = vld [vmem:[#allocation2 + $0xa9] sm:$0xff]
        %v514 = vld [vmem:[#allocation2 + $0xb1] sm:$0xff]
        %v515 = vld [vmem:[%s3 + $0x4] sm:$0xf]
        %v517 = vsel %vm448, %v499, 0
        %v520 = vsel %vm448, %v500, 0
        %v523 = vsel %vm448, %v501, 0
        %v526 = vsel %vm448, %v502, 0
        %v529 = vsel %vm448, %v503, 0
        %v532 = vsel %vm448, %v504, 0
        %v535 = vsel %vm448, %v505, 0
        %v538 = vsel %vm448, %v506, 0
        %v541 = vsel %vm448, %v507, 0
        %v544 = vsel %vm448, %v508, 0
        %v547 = vsel %vm448, %v509, 0
        %v550 = vsel %vm448, %v510, 0
        %v553 = vsel %vm448, %v511, 0
        %v556 = vsel %vm448, %v512, 0
        %v559 = vsel %vm448, %v513, 0
        %v562 = vsel %vm448, %v514, 0
        %vm564 = vcmask 1043456
        %v566 = vsel %vm564, %v515, 0
        %568 = vmatpush.msra.mxu0 0.0
        %569 = vmatpush.msra.mxu0 0.0
        %570 = vmatpush.msra.mxu0 0.0
        %571 = vmatpush.msra.mxu0 0.0
        %572 = vmatpush.msra.mxu0 0.0
        %573 = vmatpush.msra.mxu0 0.0
        %574 = vmatpush.msra.mxu0 0.0
        %575 = vmatpush.msra.mxu0 0.0
        %576 = vmatpush.msra.mxu0 0.0
        %577 = vmatpush.msra.mxu0 0.0
        %578 = vmatpush.msra.mxu0 0.0
        %579 = vmatpush.msra.mxu0 0.0
        %580 = vmatpush.msra.mxu0 0.0
        %581 = vmatpush.msra.mxu0 0.0
        %582 = vmatpush.msra.mxu0 0.0
        %583 = vmatpush.msra.mxu0 %v566
        %584 = vmatmul.f32.gmra.mxu0 %v517
        %v585 = vpop.f32.mrf.mxu0
        %v586 = vadd.f32 0.0, %v585
        %587 = vmatmul.f32.gmra.mxu0 %v520
        %v588 = vpop.f32.mrf.mxu0
        %v589 = vadd.f32 0.0, %v588
        %590 = vmatmul.f32.gmra.mxu0 %v523
        %v591 = vpop.f32.mrf.mxu0
        %v592 = vadd.f32 0.0, %v591
        %593 = vmatmul.f32.gmra.mxu0 %v526
        %v594 = vpop.f32.mrf.mxu0
        %v595 = vadd.f32 0.0, %v594
        %596 = vmatmul.f32.gmra.mxu0 %v529
        %v597 = vpop.f32.mrf.mxu0
        %v598 = vadd.f32 0.0, %v597
        %599 = vmatmul.f32.gmra.mxu0 %v532
        %v600 = vpop.f32.mrf.mxu0
        %v601 = vadd.f32 0.0, %v600
        %602 = vmatmul.f32.gmra.mxu0 %v535
        %v603 = vpop.f32.mrf.mxu0
        %v604 = vadd.f32 0.0, %v603
        %605 = vmatmul.f32.gmra.mxu0 %v538
        %v606 = vpop.f32.mrf.mxu0
        %v607 = vadd.f32 0.0, %v606
        %608 = vmatmul.f32.gmra.mxu0 %v541
        %v609 = vpop.f32.mrf.mxu0
        %v610 = vadd.f32 0.0, %v609
        %611 = vmatmul.f32.gmra.mxu0 %v544
        %v612 = vpop.f32.mrf.mxu0
        %v613 = vadd.f32 0.0, %v612
        %614 = vmatmul.f32.gmra.mxu0 %v547
        %v615 = vpop.f32.mrf.mxu0
        %v616 = vadd.f32 0.0, %v615
        %617 = vmatmul.f32.gmra.mxu0 %v550
        %v618 = vpop.f32.mrf.mxu0
        %v619 = vadd.f32 0.0, %v618
        %620 = vmatmul.f32.gmra.mxu0 %v553
        %v621 = vpop.f32.mrf.mxu0
        %v622 = vadd.f32 0.0, %v621
        %623 = vmatmul.f32.gmra.mxu0 %v556
        %v624 = vpop.f32.mrf.mxu0
        %v625 = vadd.f32 0.0, %v624
        %626 = vmatmul.f32.gmra.mxu0 %v559
        %v627 = vpop.f32.mrf.mxu0
        %v628 = vadd.f32 0.0, %v627
        %629 = vmatmul.f32.gmra.mxu0 %v562
        %v630 = vpop.f32.mrf.mxu0
        %v631 = vadd.f32 0.0, %v630
        %632 = vdwg.mxu0
        %v634 = vsel %vm448, %v482, 0
        %v637 = vsel %vm448, %v483, 0
        %v640 = vsel %vm448, %v484, 0
        %v643 = vsel %vm448, %v485, 0
        %v646 = vsel %vm448, %v486, 0
        %v649 = vsel %vm448, %v487, 0
        %v652 = vsel %vm448, %v488, 0
        %v655 = vsel %vm448, %v489, 0
        %v658 = vsel %vm448, %v490, 0
        %v661 = vsel %vm448, %v491, 0
        %v664 = vsel %vm448, %v492, 0
        %v667 = vsel %vm448, %v493, 0
        %v670 = vsel %vm448, %v494, 0
        %v673 = vsel %vm448, %v495, 0
        %v676 = vsel %vm448, %v496, 0
        %v679 = vsel %vm448, %v497, 0
        %v682 = vsel %vm564, %v498, 0
        %684 = vmatpush.msra.mxu0 0.0
        %685 = vmatpush.msra.mxu0 0.0
        %686 = vmatpush.msra.mxu0 0.0
        %687 = vmatpush.msra.mxu0 0.0
        %688 = vmatpush.msra.mxu0 0.0
        %689 = vmatpush.msra.mxu0 0.0
        %690 = vmatpush.msra.mxu0 0.0
        %691 = vmatpush.msra.mxu0 0.0
        %692 = vmatpush.msra.mxu0 0.0
        %693 = vmatpush.msra.mxu0 0.0
        %694 = vmatpush.msra.mxu0 0.0
        %695 = vmatpush.msra.mxu0 0.0
        %696 = vmatpush.msra.mxu0 0.0
        %697 = vmatpush.msra.mxu0 0.0
        %698 = vmatpush.msra.mxu0 0.0
        %699 = vmatpush.msra.mxu0 %v682
        %700 = vmatmul.f32.gmra.mxu0 %v634
        %v701 = vpop.f32.mrf.mxu0
        %v702 = vadd.f32 %v586, %v701
        %703 = vmatmul.f32.gmra.mxu0 %v637
        %v704 = vpop.f32.mrf.mxu0
        %v705 = vadd.f32 %v589, %v704
        %706 = vmatmul.f32.gmra.mxu0 %v640
        %v707 = vpop.f32.mrf.mxu0
        %v708 = vadd.f32 %v592, %v707
        %709 = vmatmul.f32.gmra.mxu0 %v643
        %v710 = vpop.f32.mrf.mxu0
        %v711 = vadd.f32 %v595, %v710
        %712 = vmatmul.f32.gmra.mxu0 %v646
        %v713 = vpop.f32.mrf.mxu0
        %v714 = vadd.f32 %v598, %v713
        %715 = vmatmul.f32.gmra.mxu0 %v649
        %v716 = vpop.f32.mrf.mxu0
        %v717 = vadd.f32 %v601, %v716
        %718 = vmatmul.f32.gmra.mxu0 %v652
        %v719 = vpop.f32.mrf.mxu0
        %v720 = vadd.f32 %v604, %v719
        %721 = vmatmul.f32.gmra.mxu0 %v655
        %v722 = vpop.f32.mrf.mxu0
        %v723 = vadd.f32 %v607, %v722
        %724 = vmatmul.f32.gmra.mxu0 %v658
        %v725 = vpop.f32.mrf.mxu0
        %v726 = vadd.f32 %v610, %v725
        %727 = vmatmul.f32.gmra.mxu0 %v661
        %v728 = vpop.f32.mrf.mxu0
        %v729 = vadd.f32 %v613, %v728
        %730 = vmatmul.f32.gmra.mxu0 %v664
        %v731 = vpop.f32.mrf.mxu0
        %v732 = vadd.f32 %v616, %v731
        %733 = vmatmul.f32.gmra.mxu0 %v667
        %v734 = vpop.f32.mrf.mxu0
        %v735 = vadd.f32 %v619, %v734
        %736 = vmatmul.f32.gmra.mxu0 %v670
        %v737 = vpop.f32.mrf.mxu0
        %v738 = vadd.f32 %v622, %v737
        %739 = vmatmul.f32.gmra.mxu0 %v673
        %v740 = vpop.f32.mrf.mxu0
        %v741 = vadd.f32 %v625, %v740
        %742 = vmatmul.f32.gmra.mxu0 %v676
        %v743 = vpop.f32.mrf.mxu0
        %v744 = vadd.f32 %v628, %v743
        %745 = vmatmul.f32.gmra.mxu0 %v679
        %v746 = vpop.f32.mrf.mxu0
        %v747 = vadd.f32 %v631, %v746
        %748 = vdwg.mxu0
        %v749 = vld [vmem:[#allocation2 + $0x2] sm:$0xff]
        %v750 = vld [vmem:[#allocation2 + $0xa] sm:$0xff]
        %v751 = vld [vmem:[#allocation2 + $0x1a] sm:$0xff]
        %v752 = vld [vmem:[#allocation2 + $0x22] sm:$0xff]
        %v753 = vld [vmem:[#allocation2 + $0x32] sm:$0xff]
        %v754 = vld [vmem:[#allocation2 + $0x3a] sm:$0xff]
        %v755 = vld [vmem:[#allocation2 + $0x4a] sm:$0xff]
        %v756 = vld [vmem:[#allocation2 + $0x52] sm:$0xff]
        %v757 = vld [vmem:[#allocation2 + $0x62] sm:$0xff]
        %v758 = vld [vmem:[#allocation2 + $0x6a] sm:$0xff]
        %v759 = vld [vmem:[#allocation2 + $0x7a] sm:$0xff]
        %v760 = vld [vmem:[#allocation2 + $0x82] sm:$0xff]
        %v761 = vld [vmem:[#allocation2 + $0x92] sm:$0xff]
        %v762 = vld [vmem:[#allocation2 + $0x9a] sm:$0xff]
        %v763 = vld [vmem:[#allocation2 + $0xaa] sm:$0xff]
        %v764 = vld [vmem:[#allocation2 + $0xb2] sm:$0xff]
        %v765 = vld [vmem:[%s3 + $0x8] sm:$0xf]
        %v767 = vsel %vm448, %v749, 0
        %v770 = vsel %vm448, %v750, 0
        %v773 = vsel %vm448, %v751, 0
        %v776 = vsel %vm448, %v752, 0
        %v779 = vsel %vm448, %v753, 0
        %v782 = vsel %vm448, %v754, 0
        %v785 = vsel %vm448, %v755, 0
        %v788 = vsel %vm448, %v756, 0
        %v791 = vsel %vm448, %v757, 0
        %v794 = vsel %vm448, %v758, 0
        %v797 = vsel %vm448, %v759, 0
        %v800 = vsel %vm448, %v760, 0
        %v803 = vsel %vm448, %v761, 0
        %v806 = vsel %vm448, %v762, 0
        %v809 = vsel %vm448, %v763, 0
        %v812 = vsel %vm448, %v764, 0
        %v815 = vsel %vm564, %v765, 0
        %817 = vmatpush.msra.mxu0 0.0
        %818 = vmatpush.msra.mxu0 0.0
        %819 = vmatpush.msra.mxu0 0.0
        %820 = vmatpush.msra.mxu0 0.0
        %821 = vmatpush.msra.mxu0 0.0
        %822 = vmatpush.msra.mxu0 0.0
        %823 = vmatpush.msra.mxu0 0.0
        %824 = vmatpush.msra.mxu0 0.0
        %825 = vmatpush.msra.mxu0 0.0
        %826 = vmatpush.msra.mxu0 0.0
        %827 = vmatpush.msra.mxu0 0.0
        %828 = vmatpush.msra.mxu0 0.0
        %829 = vmatpush.msra.mxu0 0.0
        %830 = vmatpush.msra.mxu0 0.0
        %831 = vmatpush.msra.mxu0 0.0
        %832 = vmatpush.msra.mxu0 %v815
        %833 = vmatmul.f32.gmra.mxu0 %v767
        %v834 = vpop.f32.mrf.mxu0
        %v835 = vadd.f32 0.0, %v834
        %836 = vmatmul.f32.gmra.mxu0 %v770
        %v837 = vpop.f32.mrf.mxu0
        %v838 = vadd.f32 0.0, %v837
        %839 = vmatmul.f32.gmra.mxu0 %v773
        %v840 = vpop.f32.mrf.mxu0
        %v841 = vadd.f32 0.0, %v840
        %842 = vmatmul.f32.gmra.mxu0 %v776
        %v843 = vpop.f32.mrf.mxu0
        %v844 = vadd.f32 0.0, %v843
        %845 = vmatmul.f32.gmra.mxu0 %v779
        %v846 = vpop.f32.mrf.mxu0
        %v847 = vadd.f32 0.0, %v846
        %848 = vmatmul.f32.gmra.mxu0 %v782
        %v849 = vpop.f32.mrf.mxu0
        %v850 = vadd.f32 0.0, %v849
        %851 = vmatmul.f32.gmra.mxu0 %v785
        %v852 = vpop.f32.mrf.mxu0
        %v853 = vadd.f32 0.0, %v852
        %854 = vmatmul.f32.gmra.mxu0 %v788
        %v855 = vpop.f32.mrf.mxu0
        %v856 = vadd.f32 0.0, %v855
        %857 = vmatmul.f32.gmra.mxu0 %v791
        %v858 = vpop.f32.mrf.mxu0
        %v859 = vadd.f32 0.0, %v858
        %860 = vmatmul.f32.gmra.mxu0 %v794
        %v861 = vpop.f32.mrf.mxu0
        %v862 = vadd.f32 0.0, %v861
        %863 = vmatmul.f32.gmra.mxu0 %v797
        %v864 = vpop.f32.mrf.mxu0
        %v865 = vadd.f32 0.0, %v864
        %866 = vmatmul.f32.gmra.mxu0 %v800
        %v867 = vpop.f32.mrf.mxu0
        %v868 = vadd.f32 0.0, %v867
        %869 = vmatmul.f32.gmra.mxu0 %v803
        %v870 = vpop.f32.mrf.mxu0
        %v871 = vadd.f32 0.0, %v870
        %872 = vmatmul.f32.gmra.mxu0 %v806
        %v873 = vpop.f32.mrf.mxu0
        %v874 = vadd.f32 0.0, %v873
        %875 = vmatmul.f32.gmra.mxu0 %v809
        %v876 = vpop.f32.mrf.mxu0
        %v877 = vadd.f32 0.0, %v876
        %878 = vmatmul.f32.gmra.mxu0 %v812
        %v879 = vpop.f32.mrf.mxu0
        %v880 = vadd.f32 0.0, %v879
        %881 = vdwg.mxu0
        %v882 = vadd.f32 %v702, %v835
        %v883 = vadd.f32 %v705, %v838
        %v884 = vadd.f32 %v708, %v841
        %v885 = vadd.f32 %v711, %v844
        %v886 = vadd.f32 %v714, %v847
        %v887 = vadd.f32 %v717, %v850
        %v888 = vadd.f32 %v720, %v853
        %v889 = vadd.f32 %v723, %v856
        %v890 = vadd.f32 %v726, %v859
        %v891 = vadd.f32 %v729, %v862
        %v892 = vadd.f32 %v732, %v865
        %v893 = vadd.f32 %v735, %v868
        %v894 = vadd.f32 %v738, %v871
        %v895 = vadd.f32 %v741, %v874
        %v896 = vadd.f32 %v744, %v877
        %v897 = vadd.f32 %v747, %v880
        %v898 = vld [vmem:[%s447] sm:$0xff]
        %v899 = vld [vmem:[%s447 + $0x8] sm:$0xff]
        %v900 = vld [vmem:[%s447 + $0x18] sm:$0xff]
        %v901 = vld [vmem:[%s447 + $0x20] sm:$0xff]
        %v902 = vld [vmem:[%s447 + $0x30] sm:$0xff]
        %v903 = vld [vmem:[%s447 + $0x38] sm:$0xff]
        %v904 = vld [vmem:[%s447 + $0x48] sm:$0xff]
        %v905 = vld [vmem:[%s447 + $0x50] sm:$0xff]
        %v906 = vld [vmem:[%s447 + $0x60] sm:$0xff]
        %v907 = vld [vmem:[%s447 + $0x68] sm:$0xff]
        %v908 = vld [vmem:[%s447 + $0x78] sm:$0xff]
        %v909 = vld [vmem:[%s447 + $0x80] sm:$0xff]
        %v910 = vld [vmem:[%s447 + $0x90] sm:$0xff]
        %v911 = vld [vmem:[%s447 + $0x98] sm:$0xff]
        %v912 = vld [vmem:[%s447 + $0xa8] sm:$0xff]
        %v913 = vld [vmem:[%s447 + $0xb0] sm:$0xff]
        %v914 = vld [vmem:[%s3 + $0xc] sm:$0xf]
        %v916 = vsel %vm448, %v898, 0
        %v919 = vsel %vm448, %v899, 0
        %v922 = vsel %vm448, %v900, 0
        %v925 = vsel %vm448, %v901, 0
        %v928 = vsel %vm448, %v902, 0
        %v931 = vsel %vm448, %v903, 0
        %v934 = vsel %vm448, %v904, 0
        %v937 = vsel %vm448, %v905, 0
        %v940 = vsel %vm448, %v906, 0
        %v943 = vsel %vm448, %v907, 0
        %v946 = vsel %vm448, %v908, 0
        %v949 = vsel %vm448, %v909, 0
        %v952 = vsel %vm448, %v910, 0
        %v955 = vsel %vm448, %v911, 0
        %v958 = vsel %vm448, %v912, 0
        %v961 = vsel %vm448, %v913, 0
        %v964 = vsel %vm564, %v914, 0
        %966 = vmatpush.msra.mxu0 0.0
        %967 = vmatpush.msra.mxu0 0.0
        %968 = vmatpush.msra.mxu0 0.0
        %969 = vmatpush.msra.mxu0 0.0
        %970 = vmatpush.msra.mxu0 0.0
        %971 = vmatpush.msra.mxu0 0.0
        %972 = vmatpush.msra.mxu0 0.0
        %973 = vmatpush.msra.mxu0 0.0
        %974 = vmatpush.msra.mxu0 0.0
        %975 = vmatpush.msra.mxu0 0.0
        %976 = vmatpush.msra.mxu0 0.0
        %977 = vmatpush.msra.mxu0 0.0
        %978 = vmatpush.msra.mxu0 0.0
        %979 = vmatpush.msra.mxu0 0.0
        %980 = vmatpush.msra.mxu0 0.0
        %981 = vmatpush.msra.mxu0 %v964
        %982 = vmatmul.f32.gmra.mxu0 %v916
        %v983 = vpop.f32.mrf.mxu0
        %v984 = vadd.f32 0.0, %v983
        %985 = vmatmul.f32.gmra.mxu0 %v919
        %v986 = vpop.f32.mrf.mxu0
        %v987 = vadd.f32 0.0, %v986
        %988 = vmatmul.f32.gmra.mxu0 %v922
        %v989 = vpop.f32.mrf.mxu0
        %v990 = vadd.f32 0.0, %v989
        %991 = vmatmul.f32.gmra.mxu0 %v925
        %v992 = vpop.f32.mrf.mxu0
        %v993 = vadd.f32 0.0, %v992
        %994 = vmatmul.f32.gmra.mxu0 %v928
        %v995 = vpop.f32.mrf.mxu0
        %v996 = vadd.f32 0.0, %v995
        %997 = vmatmul.f32.gmra.mxu0 %v931
        %v998 = vpop.f32.mrf.mxu0
        %v999 = vadd.f32 0.0, %v998
        %1000 = vmatmul.f32.gmra.mxu0 %v934
        %v1001 = vpop.f32.mrf.mxu0
        %v1002 = vadd.f32 0.0, %v1001
        %1003 = vmatmul.f32.gmra.mxu0 %v937
        %v1004 = vpop.f32.mrf.mxu0
        %v1005 = vadd.f32 0.0, %v1004
        %1006 = vmatmul.f32.gmra.mxu0 %v940
        %v1007 = vpop.f32.mrf.mxu0
        %v1008 = vadd.f32 0.0, %v1007
        %1009 = vmatmul.f32.gmra.mxu0 %v943
        %v1010 = vpop.f32.mrf.mxu0
        %v1011 = vadd.f32 0.0, %v1010
        %1012 = vmatmul.f32.gmra.mxu0 %v946
        %v1013 = vpop.f32.mrf.mxu0
        %v1014 = vadd.f32 0.0, %v1013
        %1015 = vmatmul.f32.gmra.mxu0 %v949
        %v1016 = vpop.f32.mrf.mxu0
        %v1017 = vadd.f32 0.0, %v1016
        %1018 = vmatmul.f32.gmra.mxu0 %v952
        %v1019 = vpop.f32.mrf.mxu0
        %v1020 = vadd.f32 0.0, %v1019
        %1021 = vmatmul.f32.gmra.mxu0 %v955
        %v1022 = vpop.f32.mrf.mxu0
        %v1023 = vadd.f32 0.0, %v1022
        %1024 = vmatmul.f32.gmra.mxu0 %v958
        %v1025 = vpop.f32.mrf.mxu0
        %v1026 = vadd.f32 0.0, %v1025
        %1027 = vmatmul.f32.gmra.mxu0 %v961
        %v1028 = vpop.f32.mrf.mxu0
        %v1029 = vadd.f32 0.0, %v1028
        %1030 = vdwg.mxu0
        %v1031 = vadd.f32 %v882, %v984
        %v1032 = vadd.f32 %v883, %v987
        %v1033 = vadd.f32 %v884, %v990
        %v1034 = vadd.f32 %v885, %v993
        %v1035 = vadd.f32 %v886, %v996
        %v1036 = vadd.f32 %v887, %v999
        %v1037 = vadd.f32 %v888, %v1002
        %v1038 = vadd.f32 %v889, %v1005
        %v1039 = vadd.f32 %v890, %v1008
        %v1040 = vadd.f32 %v891, %v1011
        %v1041 = vadd.f32 %v892, %v1014
        %v1042 = vadd.f32 %v893, %v1017
        %v1043 = vadd.f32 %v894, %v1020
        %v1044 = vadd.f32 %v895, %v1023
        %v1045 = vadd.f32 %v896, %v1026
        %v1046 = vadd.f32 %v897, %v1029
        %v1047 = vld [vmem:[%s447 + $0x1] sm:$0xff]
        %v1048 = vld [vmem:[%s447 + $0x9] sm:$0xff]
        %v1049 = vld [vmem:[%s447 + $0x19] sm:$0xff]
        %v1050 = vld [vmem:[%s447 + $0x21] sm:$0xff]
        %v1051 = vld [vmem:[%s447 + $0x31] sm:$0xff]
        %v1052 = vld [vmem:[%s447 + $0x39] sm:$0xff]
        %v1053 = vld [vmem:[%s447 + $0x49] sm:$0xff]
        %v1054 = vld [vmem:[%s447 + $0x51] sm:$0xff]
        %v1055 = vld [vmem:[%s447 + $0x61] sm:$0xff]
        %v1056 = vld [vmem:[%s447 + $0x69] sm:$0xff]
        %v1057 = vld [vmem:[%s447 + $0x79] sm:$0xff]
        %v1058 = vld [vmem:[%s447 + $0x81] sm:$0xff]
        %v1059 = vld [vmem:[%s447 + $0x91] sm:$0xff]
        %v1060 = vld [vmem:[%s447 + $0x99] sm:$0xff]
        %v1061 = vld [vmem:[%s447 + $0xa9] sm:$0xff]
        %v1062 = vld [vmem:[%s447 + $0xb1] sm:$0xff]
        %v1063 = vld [vmem:[%s3 + $0x10] sm:$0xf]
        %v1065 = vsel %vm448, %v1047, 0
        %v1068 = vsel %vm448, %v1048, 0
        %v1071 = vsel %vm448, %v1049, 0
        %v1074 = vsel %vm448, %v1050, 0
        %v1077 = vsel %vm448, %v1051, 0
        %v1080 = vsel %vm448, %v1052, 0
        %v1083 = vsel %vm448, %v1053, 0
        %v1086 = vsel %vm448, %v1054, 0
        %v1089 = vsel %vm448, %v1055, 0
        %v1092 = vsel %vm448, %v1056, 0
        %v1095 = vsel %vm448, %v1057, 0
        %v1098 = vsel %vm448, %v1058, 0
        %v1101 = vsel %vm448, %v1059, 0
        %v1104 = vsel %vm448, %v1060, 0
        %v1107 = vsel %vm448, %v1061, 0
        %v1110 = vsel %vm448, %v1062, 0
        %v1113 = vsel %vm564, %v1063, 0
        %1115 = vmatpush.msra.mxu0 0.0
        %1116 = vmatpush.msra.mxu0 0.0
        %1117 = vmatpush.msra.mxu0 0.0
        %1118 = vmatpush.msra.mxu0 0.0
        %1119 = vmatpush.msra.mxu0 0.0
        %1120 = vmatpush.msra.mxu0 0.0
        %1121 = vmatpush.msra.mxu0 0.0
        %1122 = vmatpush.msra.mxu0 0.0
        %1123 = vmatpush.msra.mxu0 0.0
        %1124 = vmatpush.msra.mxu0 0.0
        %1125 = vmatpush.msra.mxu0 0.0
        %1126 = vmatpush.msra.mxu0 0.0
        %1127 = vmatpush.msra.mxu0 0.0
        %1128 = vmatpush.msra.mxu0 0.0
        %1129 = vmatpush.msra.mxu0 0.0
        %1130 = vmatpush.msra.mxu0 %v1113
        %1131 = vmatmul.f32.gmra.mxu0 %v1065
        %v1132 = vpop.f32.mrf.mxu0
        %v1133 = vadd.f32 0.0, %v1132
        %1134 = vmatmul.f32.gmra.mxu0 %v1068
        %v1135 = vpop.f32.mrf.mxu0
        %v1136 = vadd.f32 0.0, %v1135
        %1137 = vmatmul.f32.gmra.mxu0 %v1071
        %v1138 = vpop.f32.mrf.mxu0
        %v1139 = vadd.f32 0.0, %v1138
        %1140 = vmatmul.f32.gmra.mxu0 %v1074
        %v1141 = vpop.f32.mrf.mxu0
        %v1142 = vadd.f32 0.0, %v1141
        %1143 = vmatmul.f32.gmra.mxu0 %v1077
        %v1144 = vpop.f32.mrf.mxu0
        %v1145 = vadd.f32 0.0, %v1144
        %1146 = vmatmul.f32.gmra.mxu0 %v1080
        %v1147 = vpop.f32.mrf.mxu0
        %v1148 = vadd.f32 0.0, %v1147
        %1149 = vmatmul.f32.gmra.mxu0 %v1083
        %v1150 = vpop.f32.mrf.mxu0
        %v1151 = vadd.f32 0.0, %v1150
        %1152 = vmatmul.f32.gmra.mxu0 %v1086
        %v1153 = vpop.f32.mrf.mxu0
        %v1154 = vadd.f32 0.0, %v1153
        %1155 = vmatmul.f32.gmra.mxu0 %v1089
        %v1156 = vpop.f32.mrf.mxu0
        %v1157 = vadd.f32 0.0, %v1156
        %1158 = vmatmul.f32.gmra.mxu0 %v1092
        %v1159 = vpop.f32.mrf.mxu0
        %v1160 = vadd.f32 0.0, %v1159
        %1161 = vmatmul.f32.gmra.mxu0 %v1095
        %v1162 = vpop.f32.mrf.mxu0
        %v1163 = vadd.f32 0.0, %v1162
        %1164 = vmatmul.f32.gmra.mxu0 %v1098
        %v1165 = vpop.f32.mrf.mxu0
        %v1166 = vadd.f32 0.0, %v1165
        %1167 = vmatmul.f32.gmra.mxu0 %v1101
        %v1168 = vpop.f32.mrf.mxu0
        %v1169 = vadd.f32 0.0, %v1168
        %1170 = vmatmul.f32.gmra.mxu0 %v1104
        %v1171 = vpop.f32.mrf.mxu0
        %v1172 = vadd.f32 0.0, %v1171
        %1173 = vmatmul.f32.gmra.mxu0 %v1107
        %v1174 = vpop.f32.mrf.mxu0
        %v1175 = vadd.f32 0.0, %v1174
        %1176 = vmatmul.f32.gmra.mxu0 %v1110
        %v1177 = vpop.f32.mrf.mxu0
        %v1178 = vadd.f32 0.0, %v1177
        %1179 = vdwg.mxu0
        %v1180 = vadd.f32 %v1031, %v1133
        %v1181 = vadd.f32 %v1032, %v1136
        %v1182 = vadd.f32 %v1033, %v1139
        %v1183 = vadd.f32 %v1034, %v1142
        %v1184 = vadd.f32 %v1035, %v1145
        %v1185 = vadd.f32 %v1036, %v1148
        %v1186 = vadd.f32 %v1037, %v1151
        %v1187 = vadd.f32 %v1038, %v1154
        %v1188 = vadd.f32 %v1039, %v1157
        %v1189 = vadd.f32 %v1040, %v1160
        %v1190 = vadd.f32 %v1041, %v1163
        %v1191 = vadd.f32 %v1042, %v1166
        %v1192 = vadd.f32 %v1043, %v1169
        %v1193 = vadd.f32 %v1044, %v1172
        %v1194 = vadd.f32 %v1045, %v1175
        %v1195 = vadd.f32 %v1046, %v1178
        %v1196 = vld [vmem:[%s447 + $0x2] sm:$0xff]
        %v1197 = vld [vmem:[%s447 + $0xa] sm:$0xff]
        %v1198 = vld [vmem:[%s447 + $0x1a] sm:$0xff]
        %v1199 = vld [vmem:[%s447 + $0x22] sm:$0xff]
        %v1200 = vld [vmem:[%s447 + $0x32] sm:$0xff]
        %v1201 = vld [vmem:[%s447 + $0x3a] sm:$0xff]
        %v1202 = vld [vmem:[%s447 + $0x4a] sm:$0xff]
        %v1203 = vld [vmem:[%s447 + $0x52] sm:$0xff]
        %v1204 = vld [vmem:[%s447 + $0x62] sm:$0xff]
        %v1205 = vld [vmem:[%s447 + $0x6a] sm:$0xff]
        %v1206 = vld [vmem:[%s447 + $0x7a] sm:$0xff]
        %v1207 = vld [vmem:[%s447 + $0x82] sm:$0xff]
        %v1208 = vld [vmem:[%s447 + $0x92] sm:$0xff]
        %v1209 = vld [vmem:[%s447 + $0x9a] sm:$0xff]
        %v1210 = vld [vmem:[%s447 + $0xaa] sm:$0xff]
        %v1211 = vld [vmem:[%s447 + $0xb2] sm:$0xff]
        %v1212 = vld [vmem:[%s3 + $0x14] sm:$0xf]
        %v1214 = vsel %vm448, %v1196, 0
        %v1217 = vsel %vm448, %v1197, 0
        %v1220 = vsel %vm448, %v1198, 0
        %v1223 = vsel %vm448, %v1199, 0
        %v1226 = vsel %vm448, %v1200, 0
        %v1229 = vsel %vm448, %v1201, 0
        %v1232 = vsel %vm448, %v1202, 0
        %v1235 = vsel %vm448, %v1203, 0
        %v1238 = vsel %vm448, %v1204, 0
        %v1241 = vsel %vm448, %v1205, 0
        %v1244 = vsel %vm448, %v1206, 0
        %v1247 = vsel %vm448, %v1207, 0
        %v1250 = vsel %vm448, %v1208, 0
        %v1253 = vsel %vm448, %v1209, 0
        %v1256 = vsel %vm448, %v1210, 0
        %v1259 = vsel %vm448, %v1211, 0
        %v1262 = vsel %vm564, %v1212, 0
        %1264 = vmatpush.msra.mxu0 0.0
        %1265 = vmatpush.msra.mxu0 0.0
        %1266 = vmatpush.msra.mxu0 0.0
        %1267 = vmatpush.msra.mxu0 0.0
        %1268 = vmatpush.msra.mxu0 0.0
        %1269 = vmatpush.msra.mxu0 0.0
        %1270 = vmatpush.msra.mxu0 0.0
        %1271 = vmatpush.msra.mxu0 0.0
        %1272 = vmatpush.msra.mxu0 0.0
        %1273 = vmatpush.msra.mxu0 0.0
        %1274 = vmatpush.msra.mxu0 0.0
        %1275 = vmatpush.msra.mxu0 0.0
        %1276 = vmatpush.msra.mxu0 0.0
        %1277 = vmatpush.msra.mxu0 0.0
        %1278 = vmatpush.msra.mxu0 0.0
        %1279 = vmatpush.msra.mxu0 %v1262
        %1280 = vmatmul.f32.gmra.mxu0 %v1214
        %v1281 = vpop.f32.mrf.mxu0
        %v1282 = vadd.f32 0.0, %v1281
        %1283 = vmatmul.f32.gmra.mxu0 %v1217
        %v1284 = vpop.f32.mrf.mxu0
        %v1285 = vadd.f32 0.0, %v1284
        %1286 = vmatmul.f32.gmra.mxu0 %v1220
        %v1287 = vpop.f32.mrf.mxu0
        %v1288 = vadd.f32 0.0, %v1287
        %1289 = vmatmul.f32.gmra.mxu0 %v1223
        %v1290 = vpop.f32.mrf.mxu0
        %v1291 = vadd.f32 0.0, %v1290
        %1292 = vmatmul.f32.gmra.mxu0 %v1226
        %v1293 = vpop.f32.mrf.mxu0
        %v1294 = vadd.f32 0.0, %v1293
        %1295 = vmatmul.f32.gmra.mxu0 %v1229
        %v1296 = vpop.f32.mrf.mxu0
        %v1297 = vadd.f32 0.0, %v1296
        %1298 = vmatmul.f32.gmra.mxu0 %v1232
        %v1299 = vpop.f32.mrf.mxu0
        %v1300 = vadd.f32 0.0, %v1299
        %1301 = vmatmul.f32.gmra.mxu0 %v1235
        %v1302 = vpop.f32.mrf.mxu0
        %v1303 = vadd.f32 0.0, %v1302
        %1304 = vmatmul.f32.gmra.mxu0 %v1238
        %v1305 = vpop.f32.mrf.mxu0
        %v1306 = vadd.f32 0.0, %v1305
        %1307 = vmatmul.f32.gmra.mxu0 %v1241
        %v1308 = vpop.f32.mrf.mxu0
        %v1309 = vadd.f32 0.0, %v1308
        %1310 = vmatmul.f32.gmra.mxu0 %v1244
        %v1311 = vpop.f32.mrf.mxu0
        %v1312 = vadd.f32 0.0, %v1311
        %1313 = vmatmul.f32.gmra.mxu0 %v1247
        %v1314 = vpop.f32.mrf.mxu0
        %v1315 = vadd.f32 0.0, %v1314
        %1316 = vmatmul.f32.gmra.mxu0 %v1250
        %v1317 = vpop.f32.mrf.mxu0
        %v1318 = vadd.f32 0.0, %v1317
        %1319 = vmatmul.f32.gmra.mxu0 %v1253
        %v1320 = vpop.f32.mrf.mxu0
        %v1321 = vadd.f32 0.0, %v1320
        %1322 = vmatmul.f32.gmra.mxu0 %v1256
        %v1323 = vpop.f32.mrf.mxu0
        %v1324 = vadd.f32 0.0, %v1323
        %1325 = vmatmul.f32.gmra.mxu0 %v1259
        %v1326 = vpop.f32.mrf.mxu0
        %v1327 = vadd.f32 0.0, %v1326
        %1328 = vdwg.mxu0
        %v1329 = vadd.f32 %v1180, %v1282
        %v1330 = vadd.f32 %v1181, %v1285
        %v1331 = vadd.f32 %v1182, %v1288
        %v1332 = vadd.f32 %v1183, %v1291
        %v1333 = vadd.f32 %v1184, %v1294
        %v1334 = vadd.f32 %v1185, %v1297
        %v1335 = vadd.f32 %v1186, %v1300
        %v1336 = vadd.f32 %v1187, %v1303
        %v1337 = vadd.f32 %v1188, %v1306
        %v1338 = vadd.f32 %v1189, %v1309
        %v1339 = vadd.f32 %v1190, %v1312
        %v1340 = vadd.f32 %v1191, %v1315
        %v1341 = vadd.f32 %v1192, %v1318
        %v1342 = vadd.f32 %v1193, %v1321
        %v1343 = vadd.f32 %v1194, %v1324
        %v1344 = vadd.f32 %v1195, %v1327
        %s1345 = scalar_lea.vmem [#allocation2], 48
        %v1346 = vld [vmem:[%s1345] sm:$0xff]
        %v1347 = vld [vmem:[%s1345 + $0x8] sm:$0xff]
        %v1348 = vld [vmem:[%s1345 + $0x18] sm:$0xff]
        %v1349 = vld [vmem:[%s1345 + $0x20] sm:$0xff]
        %v1350 = vld [vmem:[%s1345 + $0x30] sm:$0xff]
        %v1351 = vld [vmem:[%s1345 + $0x38] sm:$0xff]
        %v1352 = vld [vmem:[%s1345 + $0x48] sm:$0xff]
        %v1353 = vld [vmem:[%s1345 + $0x50] sm:$0xff]
        %v1354 = vld [vmem:[%s1345 + $0x60] sm:$0xff]
        %v1355 = vld [vmem:[%s1345 + $0x68] sm:$0xff]
        %v1356 = vld [vmem:[%s1345 + $0x78] sm:$0xff]
        %v1357 = vld [vmem:[%s1345 + $0x80] sm:$0xff]
        %v1358 = vld [vmem:[%s1345 + $0x90] sm:$0xff]
        %v1359 = vld [vmem:[%s1345 + $0x98] sm:$0xff]
        %v1360 = vld [vmem:[%s1345 + $0xa8] sm:$0xff]
        %v1361 = vld [vmem:[%s1345 + $0xb0] sm:$0xff]
        %v1362 = vld [vmem:[%s3 + $0x18] sm:$0xf]
        %v1364 = vsel %vm448, %v1346, 0
        %v1367 = vsel %vm448, %v1347, 0
        %v1370 = vsel %vm448, %v1348, 0
        %v1373 = vsel %vm448, %v1349, 0
        %v1376 = vsel %vm448, %v1350, 0
        %v1379 = vsel %vm448, %v1351, 0
        %v1382 = vsel %vm448, %v1352, 0
        %v1385 = vsel %vm448, %v1353, 0
        %v1388 = vsel %vm448, %v1354, 0
        %v1391 = vsel %vm448, %v1355, 0
        %v1394 = vsel %vm448, %v1356, 0
        %v1397 = vsel %vm448, %v1357, 0
        %v1400 = vsel %vm448, %v1358, 0
        %v1403 = vsel %vm448, %v1359, 0
        %v1406 = vsel %vm448, %v1360, 0
        %v1409 = vsel %vm448, %v1361, 0
        %v1412 = vsel %vm564, %v1362, 0
        %1414 = vmatpush.msra.mxu0 0.0
        %1415 = vmatpush.msra.mxu0 0.0
        %1416 = vmatpush.msra.mxu0 0.0
        %1417 = vmatpush.msra.mxu0 0.0
        %1418 = vmatpush.msra.mxu0 0.0
        %1419 = vmatpush.msra.mxu0 0.0
        %1420 = vmatpush.msra.mxu0 0.0
        %1421 = vmatpush.msra.mxu0 0.0
        %1422 = vmatpush.msra.mxu0 0.0
        %1423 = vmatpush.msra.mxu0 0.0
        %1424 = vmatpush.msra.mxu0 0.0
        %1425 = vmatpush.msra.mxu0 0.0
        %1426 = vmatpush.msra.mxu0 0.0
        %1427 = vmatpush.msra.mxu0 0.0
        %1428 = vmatpush.msra.mxu0 0.0
        %1429 = vmatpush.msra.mxu0 %v1412
        %1430 = vmatmul.f32.gmra.mxu0 %v1364
        %v1431 = vpop.f32.mrf.mxu0
        %v1432 = vadd.f32 0.0, %v1431
        %1433 = vmatmul.f32.gmra.mxu0 %v1367
        %v1434 = vpop.f32.mrf.mxu0
        %v1435 = vadd.f32 0.0, %v1434
        %1436 = vmatmul.f32.gmra.mxu0 %v1370
        %v1437 = vpop.f32.mrf.mxu0
        %v1438 = vadd.f32 0.0, %v1437
        %1439 = vmatmul.f32.gmra.mxu0 %v1373
        %v1440 = vpop.f32.mrf.mxu0
        %v1441 = vadd.f32 0.0, %v1440
        %1442 = vmatmul.f32.gmra.mxu0 %v1376
        %v1443 = vpop.f32.mrf.mxu0
        %v1444 = vadd.f32 0.0, %v1443
        %1445 = vmatmul.f32.gmra.mxu0 %v1379
        %v1446 = vpop.f32.mrf.mxu0
        %v1447 = vadd.f32 0.0, %v1446
        %1448 = vmatmul.f32.gmra.mxu0 %v1382
        %v1449 = vpop.f32.mrf.mxu0
        %v1450 = vadd.f32 0.0, %v1449
        %1451 = vmatmul.f32.gmra.mxu0 %v1385
        %v1452 = vpop.f32.mrf.mxu0
        %v1453 = vadd.f32 0.0, %v1452
        %1454 = vmatmul.f32.gmra.mxu0 %v1388
        %v1455 = vpop.f32.mrf.mxu0
        %v1456 = vadd.f32 0.0, %v1455
        %1457 = vmatmul.f32.gmra.mxu0 %v1391
        %v1458 = vpop.f32.mrf.mxu0
        %v1459 = vadd.f32 0.0, %v1458
        %1460 = vmatmul.f32.gmra.mxu0 %v1394
        %v1461 = vpop.f32.mrf.mxu0
        %v1462 = vadd.f32 0.0, %v1461
        %1463 = vmatmul.f32.gmra.mxu0 %v1397
        %v1464 = vpop.f32.mrf.mxu0
        %v1465 = vadd.f32 0.0, %v1464
        %1466 = vmatmul.f32.gmra.mxu0 %v1400
        %v1467 = vpop.f32.mrf.mxu0
        %v1468 = vadd.f32 0.0, %v1467
        %1469 = vmatmul.f32.gmra.mxu0 %v1403
        %v1470 = vpop.f32.mrf.mxu0
        %v1471 = vadd.f32 0.0, %v1470
        %1472 = vmatmul.f32.gmra.mxu0 %v1406
        %v1473 = vpop.f32.mrf.mxu0
        %v1474 = vadd.f32 0.0, %v1473
        %1475 = vmatmul.f32.gmra.mxu0 %v1409
        %v1476 = vpop.f32.mrf.mxu0
        %v1477 = vadd.f32 0.0, %v1476
        %1478 = vdwg.mxu0
        %v1479 = vadd.f32 %v1329, %v1432
        %v1480 = vadd.f32 %v1330, %v1435
        %v1481 = vadd.f32 %v1331, %v1438
        %v1482 = vadd.f32 %v1332, %v1441
        %v1483 = vadd.f32 %v1333, %v1444
        %v1484 = vadd.f32 %v1334, %v1447
        %v1485 = vadd.f32 %v1335, %v1450
        %v1486 = vadd.f32 %v1336, %v1453
        %v1487 = vadd.f32 %v1337, %v1456
        %v1488 = vadd.f32 %v1338, %v1459
        %v1489 = vadd.f32 %v1339, %v1462
        %v1490 = vadd.f32 %v1340, %v1465
        %v1491 = vadd.f32 %v1341, %v1468
        %v1492 = vadd.f32 %v1342, %v1471
        %v1493 = vadd.f32 %v1343, %v1474
        %v1494 = vadd.f32 %v1344, %v1477
        %v1495 = vld [vmem:[%s1345 + $0x1] sm:$0xff]
        %v1496 = vld [vmem:[%s1345 + $0x9] sm:$0xff]
        %v1497 = vld [vmem:[%s1345 + $0x19] sm:$0xff]
        %v1498 = vld [vmem:[%s1345 + $0x21] sm:$0xff]
        %v1499 = vld [vmem:[%s1345 + $0x31] sm:$0xff]
        %v1500 = vld [vmem:[%s1345 + $0x39] sm:$0xff]
        %v1501 = vld [vmem:[%s1345 + $0x49] sm:$0xff]
        %v1502 = vld [vmem:[%s1345 + $0x51] sm:$0xff]
        %v1503 = vld [vmem:[%s1345 + $0x61] sm:$0xff]
        %v1504 = vld [vmem:[%s1345 + $0x69] sm:$0xff]
        %v1505 = vld [vmem:[%s1345 + $0x79] sm:$0xff]
        %v1506 = vld [vmem:[%s1345 + $0x81] sm:$0xff]
        %v1507 = vld [vmem:[%s1345 + $0x91] sm:$0xff]
        %v1508 = vld [vmem:[%s1345 + $0x99] sm:$0xff]
        %v1509 = vld [vmem:[%s1345 + $0xa9] sm:$0xff]
        %v1510 = vld [vmem:[%s1345 + $0xb1] sm:$0xff]
        %v1511 = vld [vmem:[%s3 + $0x1c] sm:$0xf]
        %v1513 = vsel %vm448, %v1495, 0
        %v1516 = vsel %vm448, %v1496, 0
        %v1519 = vsel %vm448, %v1497, 0
        %v1522 = vsel %vm448, %v1498, 0
        %v1525 = vsel %vm448, %v1499, 0
        %v1528 = vsel %vm448, %v1500, 0
        %v1531 = vsel %vm448, %v1501, 0
        %v1534 = vsel %vm448, %v1502, 0
        %v1537 = vsel %vm448, %v1503, 0
        %v1540 = vsel %vm448, %v1504, 0
        %v1543 = vsel %vm448, %v1505, 0
        %v1546 = vsel %vm448, %v1506, 0
        %v1549 = vsel %vm448, %v1507, 0
        %v1552 = vsel %vm448, %v1508, 0
        %v1555 = vsel %vm448, %v1509, 0
        %v1558 = vsel %vm448, %v1510, 0
        %v1561 = vsel %vm564, %v1511, 0
        %1563 = vmatpush.msra.mxu0 0.0
        %1564 = vmatpush.msra.mxu0 0.0
        %1565 = vmatpush.msra.mxu0 0.0
        %1566 = vmatpush.msra.mxu0 0.0
        %1567 = vmatpush.msra.mxu0 0.0
        %1568 = vmatpush.msra.mxu0 0.0
        %1569 = vmatpush.msra.mxu0 0.0
        %1570 = vmatpush.msra.mxu0 0.0
        %1571 = vmatpush.msra.mxu0 0.0
        %1572 = vmatpush.msra.mxu0 0.0
        %1573 = vmatpush.msra.mxu0 0.0
        %1574 = vmatpush.msra.mxu0 0.0
        %1575 = vmatpush.msra.mxu0 0.0
        %1576 = vmatpush.msra.mxu0 0.0
        %1577 = vmatpush.msra.mxu0 0.0
        %1578 = vmatpush.msra.mxu0 %v1561
        %1579 = vmatmul.f32.gmra.mxu0 %v1513
        %v1580 = vpop.f32.mrf.mxu0
        %v1581 = vadd.f32 0.0, %v1580
        %1582 = vmatmul.f32.gmra.mxu0 %v1516
        %v1583 = vpop.f32.mrf.mxu0
        %v1584 = vadd.f32 0.0, %v1583
        %1585 = vmatmul.f32.gmra.mxu0 %v1519
        %v1586 = vpop.f32.mrf.mxu0
        %v1587 = vadd.f32 0.0, %v1586
        %1588 = vmatmul.f32.gmra.mxu0 %v1522
        %v1589 = vpop.f32.mrf.mxu0
        %v1590 = vadd.f32 0.0, %v1589
        %1591 = vmatmul.f32.gmra.mxu0 %v1525
        %v1592 = vpop.f32.mrf.mxu0
        %v1593 = vadd.f32 0.0, %v1592
        %1594 = vmatmul.f32.gmra.mxu0 %v1528
        %v1595 = vpop.f32.mrf.mxu0
        %v1596 = vadd.f32 0.0, %v1595
        %1597 = vmatmul.f32.gmra.mxu0 %v1531
        %v1598 = vpop.f32.mrf.mxu0
        %v1599 = vadd.f32 0.0, %v1598
        %1600 = vmatmul.f32.gmra.mxu0 %v1534
        %v1601 = vpop.f32.mrf.mxu0
        %v1602 = vadd.f32 0.0, %v1601
        %1603 = vmatmul.f32.gmra.mxu0 %v1537
        %v1604 = vpop.f32.mrf.mxu0
        %v1605 = vadd.f32 0.0, %v1604
        %1606 = vmatmul.f32.gmra.mxu0 %v1540
        %v1607 = vpop.f32.mrf.mxu0
        %v1608 = vadd.f32 0.0, %v1607
        %1609 = vmatmul.f32.gmra.mxu0 %v1543
        %v1610 = vpop.f32.mrf.mxu0
        %v1611 = vadd.f32 0.0, %v1610
        %1612 = vmatmul.f32.gmra.mxu0 %v1546
        %v1613 = vpop.f32.mrf.mxu0
        %v1614 = vadd.f32 0.0, %v1613
        %1615 = vmatmul.f32.gmra.mxu0 %v1549
        %v1616 = vpop.f32.mrf.mxu0
        %v1617 = vadd.f32 0.0, %v1616
        %1618 = vmatmul.f32.gmra.mxu0 %v1552
        %v1619 = vpop.f32.mrf.mxu0
        %v1620 = vadd.f32 0.0, %v1619
        %1621 = vmatmul.f32.gmra.mxu0 %v1555
        %v1622 = vpop.f32.mrf.mxu0
        %v1623 = vadd.f32 0.0, %v1622
        %1624 = vmatmul.f32.gmra.mxu0 %v1558
        %v1625 = vpop.f32.mrf.mxu0
        %v1626 = vadd.f32 0.0, %v1625
        %1627 = vdwg.mxu0
        %v1628 = vadd.f32 %v1479, %v1581
        %v1629 = vadd.f32 %v1480, %v1584
        %v1630 = vadd.f32 %v1481, %v1587
        %v1631 = vadd.f32 %v1482, %v1590
        %v1632 = vadd.f32 %v1483, %v1593
        %v1633 = vadd.f32 %v1484, %v1596
        %v1634 = vadd.f32 %v1485, %v1599
        %v1635 = vadd.f32 %v1486, %v1602
        %v1636 = vadd.f32 %v1487, %v1605
        %v1637 = vadd.f32 %v1488, %v1608
        %v1638 = vadd.f32 %v1489, %v1611
        %v1639 = vadd.f32 %v1490, %v1614
        %v1640 = vadd.f32 %v1491, %v1617
        %v1641 = vadd.f32 %v1492, %v1620
        %v1642 = vadd.f32 %v1493, %v1623
        %v1643 = vadd.f32 %v1494, %v1626
        %v1644 = vld [vmem:[%s1345 + $0x2] sm:$0xff]
        %v1645 = vld [vmem:[%s1345 + $0xa] sm:$0xff]
        %v1646 = vld [vmem:[%s1345 + $0x1a] sm:$0xff]
        %v1647 = vld [vmem:[%s1345 + $0x22] sm:$0xff]
        %v1648 = vld [vmem:[%s1345 + $0x32] sm:$0xff]
        %v1649 = vld [vmem:[%s1345 + $0x3a] sm:$0xff]
        %v1650 = vld [vmem:[%s1345 + $0x4a] sm:$0xff]
        %v1651 = vld [vmem:[%s1345 + $0x52] sm:$0xff]
        %v1652 = vld [vmem:[%s1345 + $0x62] sm:$0xff]
        %v1653 = vld [vmem:[%s1345 + $0x6a] sm:$0xff]
        %v1654 = vld [vmem:[%s1345 + $0x7a] sm:$0xff]
        %v1655 = vld [vmem:[%s1345 + $0x82] sm:$0xff]
        %v1656 = vld [vmem:[%s1345 + $0x92] sm:$0xff]
        %v1657 = vld [vmem:[%s1345 + $0x9a] sm:$0xff]
        %v1658 = vld [vmem:[%s1345 + $0xaa] sm:$0xff]
        %v1659 = vld [vmem:[%s1345 + $0xb2] sm:$0xff]
        %v1660 = vld [vmem:[%s3 + $0x20] sm:$0xf]
        %v1662 = vsel %vm448, %v1644, 0
        %v1665 = vsel %vm448, %v1645, 0
        %v1668 = vsel %vm448, %v1646, 0
        %v1671 = vsel %vm448, %v1647, 0
        %v1674 = vsel %vm448, %v1648, 0
        %v1677 = vsel %vm448, %v1649, 0
        %v1680 = vsel %vm448, %v1650, 0
        %v1683 = vsel %vm448, %v1651, 0
        %v1686 = vsel %vm448, %v1652, 0
        %v1689 = vsel %vm448, %v1653, 0
        %v1692 = vsel %vm448, %v1654, 0
        %v1695 = vsel %vm448, %v1655, 0
        %v1698 = vsel %vm448, %v1656, 0
        %v1701 = vsel %vm448, %v1657, 0
        %v1704 = vsel %vm448, %v1658, 0
        %v1707 = vsel %vm448, %v1659, 0
        %v1710 = vsel %vm564, %v1660, 0
        %1712 = vmatpush.msra.mxu0 0.0
        %1713 = vmatpush.msra.mxu0 0.0
        %1714 = vmatpush.msra.mxu0 0.0
        %1715 = vmatpush.msra.mxu0 0.0
        %1716 = vmatpush.msra.mxu0 0.0
        %1717 = vmatpush.msra.mxu0 0.0
        %1718 = vmatpush.msra.mxu0 0.0
        %1719 = vmatpush.msra.mxu0 0.0
        %1720 = vmatpush.msra.mxu0 0.0
        %1721 = vmatpush.msra.mxu0 0.0
        %1722 = vmatpush.msra.mxu0 0.0
        %1723 = vmatpush.msra.mxu0 0.0
        %1724 = vmatpush.msra.mxu0 0.0
        %1725 = vmatpush.msra.mxu0 0.0
        %1726 = vmatpush.msra.mxu0 0.0
        %1727 = vmatpush.msra.mxu0 %v1710
        %1728 = vmatmul.f32.gmra.mxu0 %v1662
        %v1729 = vpop.f32.mrf.mxu0
        %v1730 = vadd.f32 0.0, %v1729
        %1731 = vmatmul.f32.gmra.mxu0 %v1665
        %v1732 = vpop.f32.mrf.mxu0
        %v1733 = vadd.f32 0.0, %v1732
        %1734 = vmatmul.f32.gmra.mxu0 %v1668
        %v1735 = vpop.f32.mrf.mxu0
        %v1736 = vadd.f32 0.0, %v1735
        %1737 = vmatmul.f32.gmra.mxu0 %v1671
        %v1738 = vpop.f32.mrf.mxu0
        %v1739 = vadd.f32 0.0, %v1738
        %1740 = vmatmul.f32.gmra.mxu0 %v1674
        %v1741 = vpop.f32.mrf.mxu0
        %v1742 = vadd.f32 0.0, %v1741
        %1743 = vmatmul.f32.gmra.mxu0 %v1677
        %v1744 = vpop.f32.mrf.mxu0
        %v1745 = vadd.f32 0.0, %v1744
        %1746 = vmatmul.f32.gmra.mxu0 %v1680
        %v1747 = vpop.f32.mrf.mxu0
        %v1748 = vadd.f32 0.0, %v1747
        %1749 = vmatmul.f32.gmra.mxu0 %v1683
        %v1750 = vpop.f32.mrf.mxu0
        %v1751 = vadd.f32 0.0, %v1750
        %1752 = vmatmul.f32.gmra.mxu0 %v1686
        %v1753 = vpop.f32.mrf.mxu0
        %v1754 = vadd.f32 0.0, %v1753
        %1755 = vmatmul.f32.gmra.mxu0 %v1689
        %v1756 = vpop.f32.mrf.mxu0
        %v1757 = vadd.f32 0.0, %v1756
        %1758 = vmatmul.f32.gmra.mxu0 %v1692
        %v1759 = vpop.f32.mrf.mxu0
        %v1760 = vadd.f32 0.0, %v1759
        %1761 = vmatmul.f32.gmra.mxu0 %v1695
        %v1762 = vpop.f32.mrf.mxu0
        %v1763 = vadd.f32 0.0, %v1762
        %1764 = vmatmul.f32.gmra.mxu0 %v1698
        %v1765 = vpop.f32.mrf.mxu0
        %v1766 = vadd.f32 0.0, %v1765
        %1767 = vmatmul.f32.gmra.mxu0 %v1701
        %v1768 = vpop.f32.mrf.mxu0
        %v1769 = vadd.f32 0.0, %v1768
        %1770 = vmatmul.f32.gmra.mxu0 %v1704
        %v1771 = vpop.f32.mrf.mxu0
        %v1772 = vadd.f32 0.0, %v1771
        %1773 = vmatmul.f32.gmra.mxu0 %v1707
        %v1774 = vpop.f32.mrf.mxu0
        %v1775 = vadd.f32 0.0, %v1774
        %1776 = vdwg.mxu0
        %v1777 = vadd.f32 %v1628, %v1730
        %v1778 = vadd.f32 %v1629, %v1733
        %v1779 = vadd.f32 %v1630, %v1736
        %v1780 = vadd.f32 %v1631, %v1739
        %v1781 = vadd.f32 %v1632, %v1742
        %v1782 = vadd.f32 %v1633, %v1745
        %v1783 = vadd.f32 %v1634, %v1748
        %v1784 = vadd.f32 %v1635, %v1751
        %v1785 = vadd.f32 %v1636, %v1754
        %v1786 = vadd.f32 %v1637, %v1757
        %v1787 = vadd.f32 %v1638, %v1760
        %v1788 = vadd.f32 %v1639, %v1763
        %v1789 = vadd.f32 %v1640, %v1766
        %v1790 = vadd.f32 %v1641, %v1769
        %v1791 = vadd.f32 %v1642, %v1772
        %v1792 = vadd.f32 %v1643, %v1775
        %v1793 = vsel %vm448, %v1777, 0.0
        %v1794 = vsel %vm448, %v1778, 0.0
        %v1795 = vadd.f32 %v1793, %v1794
        %v1796 = vsel %vm448, %v1779, 0.0
        %v1797 = vadd.f32 %v1795, %v1796
        %v1798 = vsel %vm448, %v1780, 0.0
        %v1799 = vadd.f32 %v1797, %v1798
        %v1800 = vsel %vm448, %v1781, 0.0
        %v1801 = vadd.f32 %v1799, %v1800
        %v1802 = vsel %vm448, %v1782, 0.0
        %v1803 = vadd.f32 %v1801, %v1802
        %v1804 = vsel %vm448, %v1783, 0.0
        %v1805 = vadd.f32 %v1803, %v1804
        %v1806 = vsel %vm448, %v1784, 0.0
        %v1807 = vadd.f32 %v1805, %v1806
        %v1808 = vsel %vm448, %v1785, 0.0
        %v1809 = vadd.f32 %v1807, %v1808
        %v1810 = vsel %vm448, %v1786, 0.0
        %v1811 = vadd.f32 %v1809, %v1810
        %v1812 = vsel %vm448, %v1787, 0.0
        %v1813 = vadd.f32 %v1811, %v1812
        %v1814 = vsel %vm448, %v1788, 0.0
        %v1815 = vadd.f32 %v1813, %v1814
        %v1816 = vsel %vm448, %v1789, 0.0
        %v1817 = vadd.f32 %v1815, %v1816
        %v1818 = vsel %vm448, %v1790, 0.0
        %v1819 = vadd.f32 %v1817, %v1818
        %v1820 = vsel %vm448, %v1791, 0.0
        %v1821 = vadd.f32 %v1819, %v1820
        %v1822 = vsel %vm448, %v1792, 0.0
        %v1823 = vadd.f32 %v1821, %v1822
        %v1824 = vrot.slane %v1823, 4
        %v1825 = vadd.f32 %v1823, %v1824
        %v1826 = vrot.slane %v1825, 2
        %v1827 = vadd.f32 %v1825, %v1826
        %v1828 = vrot.slane %v1827, 1
        %v1829 = vadd.f32 %v1827, %v1828
        %v1830 = vmul.f32 %v1829, 0.0078125
        %v1831 = vsub.f32 %v1777, %v1830
        %v1832 = vsub.f32 %v1778, %v1830
        %v1833 = vsub.f32 %v1779, %v1830
        %v1834 = vsub.f32 %v1780, %v1830
        %v1835 = vsub.f32 %v1781, %v1830
        %v1836 = vsub.f32 %v1782, %v1830
        %v1837 = vsub.f32 %v1783, %v1830
        %v1838 = vsub.f32 %v1784, %v1830
        %v1839 = vsub.f32 %v1785, %v1830
        %v1840 = vsub.f32 %v1786, %v1830
        %v1841 = vsub.f32 %v1787, %v1830
        %v1842 = vsub.f32 %v1788, %v1830
        %v1843 = vsub.f32 %v1789, %v1830
        %v1844 = vsub.f32 %v1790, %v1830
        %v1845 = vsub.f32 %v1791, %v1830
        %v1846 = vsub.f32 %v1792, %v1830
        %v1847 = vmul.f32 %v1831, %v1831
        %v1848 = vmul.f32 %v1832, %v1832
        %v1849 = vmul.f32 %v1833, %v1833
        %v1850 = vmul.f32 %v1834, %v1834
        %v1851 = vmul.f32 %v1835, %v1835
        %v1852 = vmul.f32 %v1836, %v1836
        %v1853 = vmul.f32 %v1837, %v1837
        %v1854 = vmul.f32 %v1838, %v1838
        %v1855 = vmul.f32 %v1839, %v1839
        %v1856 = vmul.f32 %v1840, %v1840
        %v1857 = vmul.f32 %v1841, %v1841
        %v1858 = vmul.f32 %v1842, %v1842
        %v1859 = vmul.f32 %v1843, %v1843
        %v1860 = vmul.f32 %v1844, %v1844
        %v1861 = vmul.f32 %v1845, %v1845
        %v1862 = vmul.f32 %v1846, %v1846
        %v1863 = vsel %vm448, %v1847, 0.0
        %v1864 = vsel %vm448, %v1848, 0.0
        %v1865 = vadd.f32 %v1863, %v1864
        %v1866 = vsel %vm448, %v1849, 0.0
        %v1867 = vadd.f32 %v1865, %v1866
        %v1868 = vsel %vm448, %v1850, 0.0
        %v1869 = vadd.f32 %v1867, %v1868
        %v1870 = vsel %vm448, %v1851, 0.0
        %v1871 = vadd.f32 %v1869, %v1870
        %v1872 = vsel %vm448, %v1852, 0.0
        %v1873 = vadd.f32 %v1871, %v1872
        %v1874 = vsel %vm448, %v1853, 0.0
        %v1875 = vadd.f32 %v1873, %v1874
        %v1876 = vsel %vm448, %v1854, 0.0
        %v1877 = vadd.f32 %v1875, %v1876
        %v1878 = vsel %vm448, %v1855, 0.0
        %v1879 = vadd.f32 %v1877, %v1878
        %v1880 = vsel %vm448, %v1856, 0.0
        %v1881 = vadd.f32 %v1879, %v1880
        %v1882 = vsel %vm448, %v1857, 0.0
        %v1883 = vadd.f32 %v1881, %v1882
        %v1884 = vsel %vm448, %v1858, 0.0
        %v1885 = vadd.f32 %v1883, %v1884
        %v1886 = vsel %vm448, %v1859, 0.0
        %v1887 = vadd.f32 %v1885, %v1886
        %v1888 = vsel %vm448, %v1860, 0.0
        %v1889 = vadd.f32 %v1887, %v1888
        %v1890 = vsel %vm448, %v1861, 0.0
        %v1891 = vadd.f32 %v1889, %v1890
        %v1892 = vsel %vm448, %v1862, 0.0
        %v1893 = vadd.f32 %v1891, %v1892
        %v1894 = vrot.slane %v1893, 4
        %v1895 = vadd.f32 %v1893, %v1894
        %v1896 = vrot.slane %v1895, 2
        %v1897 = vadd.f32 %v1895, %v1896
        %v1898 = vrot.slane %v1897, 1
        %v1899 = vadd.f32 %v1897, %v1898
        %1900 = vst.msk [vmem:[%s349] sm:$0x1] %vm426, %v1829
        %1901 = vst.msk [vmem:[%s349 + $0x1] sm:$0x1] %vm426, %v1899
        %1902 = vst.msk [vmem:[%s404] sm:$0xff] %vm448, %v1777
        %1903 = vst.msk [vmem:[%s404 + $0x8] sm:$0xff] %vm448, %v1778
        %1904 = vst.msk [vmem:[%s404 + $0x10] sm:$0xff] %vm448, %v1779
        %1905 = vst.msk [vmem:[%s404 + $0x18] sm:$0xff] %vm448, %v1780
        %1906 = vst.msk [vmem:[%s404 + $0x20] sm:$0xff] %vm448, %v1781
        %1907 = vst.msk [vmem:[%s404 + $0x28] sm:$0xff] %vm448, %v1782
        %1908 = vst.msk [vmem:[%s404 + $0x30] sm:$0xff] %vm448, %v1783
        %1909 = vst.msk [vmem:[%s404 + $0x38] sm:$0xff] %vm448, %v1784
        %1910 = vst.msk [vmem:[%s404 + $0x40] sm:$0xff] %vm448, %v1785
        %1911 = vst.msk [vmem:[%s404 + $0x48] sm:$0xff] %vm448, %v1786
        %1912 = vst.msk [vmem:[%s404 + $0x50] sm:$0xff] %vm448, %v1787
        %1913 = vst.msk [vmem:[%s404 + $0x58] sm:$0xff] %vm448, %v1788
        %1914 = vst.msk [vmem:[%s404 + $0x60] sm:$0xff] %vm448, %v1789
        %1915 = vst.msk [vmem:[%s404 + $0x68] sm:$0xff] %vm448, %v1790
        %1916 = vst.msk [vmem:[%s404 + $0x70] sm:$0xff] %vm448, %v1791
        %1917 = vst.msk [vmem:[%s404 + $0x78] sm:$0xff] %vm448, %v1792
        %s1918 = smul.u32 8, %s25
        %p1919 = scmp.lt.s32.totalorder %s24, 1
        %s1920 = scalar_select %p1919, %s24, 1
        %p1921 = scmp.lt.s32.totalorder %s1918, 15
        %s1922 = scalar_select %p1921, %s1918, 15
        %s1923 = smul.addr %s1922, 2
        %s1924 = smul.addr %s1920, 32
        %s1925 = sadd.s32 %s1923, %s1924
        %s1926 = smul.addr %s1925, 8
        %s1927 = scalar_lea.vmem %s4, %s1926
        %s1928 = sand.u32 %s191, 1
        %s1929 = scalar_lea.sflag [#allocation4], %s1928
        %s1930 = sand.u32 %s191, 1
        %s1931 = smul.addr %s1930, 2
        %s1932 = scalar_lea.vmem [#allocation3], %s1931
        // Predicated region
        $region37: #{tpu_custom_call.1} parent=35 // pred_check
          %p1933 = pneg %p173
        $region38: #{tpu_custom_call.1} parent=35 // pred_check_branch
          %1935 = sbr.rel (%p1933) target = $region40
        $region39: #{tpu_custom_call.1} parent=35 // pred_region
          %s1936 = smul.u32 8, %s25
        $region40: #{tpu_custom_call.1} parent=35 // pred_fallthru
          _
        // Predicated region
        $region41: #{tpu_custom_call.1} parent=35 // pred_check
          %p1937 = pneg %p201
        $region42: #{tpu_custom_call.1} parent=35 // pred_check_branch
          %1939 = sbr.rel (%p1937) target = $region44
        $region43: #{tpu_custom_call.1} parent=35 // pred_region
          %1941 = vsyncadd %s1929, 0
          %s1942 = smul.addr %s24, 2
          %s1943 = sadd.s32 %s25, %s1942
          %s1944 = smul.addr %s1943, 2
          %s1945 = scalar_lea.hbm %s5, %s1944
          %s1947 = sshll.u32 %s1932, 4
          %s1948 = int_to_ptr.vmem [resolvable:$true] %s1947
          %s1949 = sshll.u32 %s1945, 4
          %s1950 = int_to_ptr.hbm [resolvable:$true] %s1949
          %1952 = dma.vmem_to_hbm [thread:$0]  %s1948, 32, %s1950, %s1929
        $region44: #{tpu_custom_call.1} parent=35 // pred_fallthru
          _
      $region36: #{tpu_custom_call.1} parent=5 // pred_fallthru
        _
      %p1953 = scmp.le.s32.totalorder 2, %s15
      // Predicated region
      $region45: #{tpu_custom_call.1} parent=5 // pred_check
        %p1954 = pneg %p1953
      $region46: #{tpu_custom_call.1} parent=5 // pred_check_branch
        %1956 = sbr.rel (%p1954) target = $region48
      $region47: #{tpu_custom_call.1} parent=5 // pred_region
        %s1957 = ssub.s32 %s15, 2
        // Predicated region
        $region49: #{tpu_custom_call.1} parent=47 // pred_check
          %p1958 = pneg %p179
        $region50: #{tpu_custom_call.1} parent=47 // pred_check_branch
          %1960 = sbr.rel (%p1958) target = $region52
        $region51: #{tpu_custom_call.1} parent=47 // pred_region
          %s1961 = smul.u32 8, %s27
          %p1962 = scmp.lt.s32.totalorder %s26, 1
          %s1963 = scalar_select %p1962, %s26, 1
          %p1964 = scmp.lt.s32.totalorder %s1961, 15
          %s1965 = scalar_select %p1964, %s1961, 15
          %s1966 = smul.addr %s1965, 2
          %s1967 = smul.addr %s1963, 32
          %s1968 = sadd.s32 %s1966, %s1967
          %s1969 = smul.addr %s1968, 8
          %s1970 = scalar_lea.vmem %s4, %s1969
        $region52: #{tpu_custom_call.1} parent=47 // pred_fallthru
          _
        // Predicated region
        $region53: #{tpu_custom_call.1} parent=47 // pred_check
          %p1971 = pneg %p207
        $region54: #{tpu_custom_call.1} parent=47 // pred_check_branch
          %1973 = sbr.rel (%p1971) target = $region56
        $region55: #{tpu_custom_call.1} parent=47 // pred_region
          %s1974 = sand.u32 %s192, 1
          %s1975 = scalar_lea.sflag [#allocation4], %s1974
          %s1976 = sand.u32 %s192, 1
          %s1977 = smul.addr %s1976, 2
          %s1978 = scalar_lea.vmem [#allocation3], %s1977
          %1980 = dma.done %s1975, 32
        $region56: #{tpu_custom_call.1} parent=47 // pred_fallthru
          _
      $region48: #{tpu_custom_call.1} parent=5 // pred_fallthru
        _
    $region6: #{tpu_custom_call.1} parent=1 // loop_footer
      %s19 = sadd.s32 1, %s15
    $region7: #{tpu_custom_call.1} parent=1 // loop_footer_branch
      %14 = sbr.rel target = $region3
    $region8: #{tpu_custom_call.1} parent=1 // loop_exit
      _
    %1981 = vsyncpa [#allocation4], 1
    %s1982 = scalar_lea.sflag [#allocation4], 1
    %1983 = vsyncpa %s1982, 1

</llo_original>
